<compile_context>
chip_gen: v5e
topology: v5e:2x2
jax: 0.10.0
libtpu: 0.0.40
codegen_flags: <defaults>
</compile_context>

<pallas_src>
import numpy as np
import jax
import jax.numpy as jnp
from jax import lax
from jax.experimental import pallas as pl
from jax.experimental.pallas import tpu as pltpu


def _scgate_kernel(gate_ref, x_ref, sp_ref, wc1_ref, bc1_ref, wc2_ref, bc2_ref,
                   o_ref, mid_ref, spf_ref):
    """Per-batch kernel: spatial 3x3->3x3 conv branch + fused x*(gate+1)+spatial."""
    C, HW = x_ref.shape
    Hp2, Wp2 = sp_ref.shape
    H, W = Hp2 - 2, Wp2 - 2
    hid = mid_ref.shape[0]

    # ---- spatial branch, conv #1: 1 -> hid, 3x3, stride 1, pad 1 -------------
    sp = sp_ref[...]                                   # (H+2, W+2) loaded once
    # Hoist the 9 shifted windows; reused across all hid output channels.
    win = [[sp[dy:dy + H, dx:dx + W] for dx in range(3)] for dy in range(3)]

    # Zero border of the scratch realises conv #2's zero padding exactly.
    mid_ref[...] = jnp.zeros_like(mid_ref)
    for h in range(hid):
        acc = jnp.zeros((H, W), jnp.float32) + bc1_ref[h]
        for dy in range(3):
            for dx in range(3):
                acc = acc + wc1_ref[h * 9 + dy * 3 + dx] * win[dy][dx]
        mid_ref[h, 1:1 + H, 1:1 + W] = acc

    # ---- spatial branch, conv #2: hid -> 1, 3x3, stride 1, pad 1 -------------
    sp_out = jnp.zeros((H, W), jnp.float32) + bc2_ref[0]
    for h in range(hid):
        m = mid_ref[h]                                  # (H+2, W+2) loaded once per h
        for dy in range(3):
            for dx in range(3):
                sp_out = sp_out + wc2_ref[h * 9 + dy * 3 + dx] * m[dy:dy + H, dx:dx + W]

    # ---- flatten (H, W) -> (1, H*W) into a lane-dense scratch -----------------
    # TODO(synk): replace with an in-kernel reshape once (H,W)->(H*W,) relayout is
    # guaranteed to lower in Mosaic; the 16 static row stores are cheap and safe.
    for y in range(H):
        spf_ref[:, y * W:(y + 1) * W] = sp_out[y:y + 1, :]

    # ---- fused elementwise: x * gate + spatial + x  (fully vectorized) --------
    # gate_ref: (C, 1) lane-broadcast; spf_ref: (1, H*W) sublane-broadcast.
    o_ref[...] = x_ref[...] * (gate_ref[...] + 1.0) + spf_ref[...]


def scgate_forward(x, spatial_prompt, channel_prompt, params):
    B, C, H, W = x.shape
    hid = params["w1"].shape[0]

    # ---- channel gate MLP in plain JAX (a few hundred FLOPs; no Pallas call) --
    h1 = jnp.dot(channel_prompt, params["w1"].T,
                 precision=lax.Precision.HIGHEST) + params["b1"]
    h1 = jax.nn.gelu(h1, approximate=False)
    gate = jax.nn.sigmoid(
        jnp.dot(h1, params["w2"].T, precision=lax.Precision.HIGHEST)
        + params["b2"])                                        # [B, C]
    gate3 = gate[:, :, None].astype(jnp.float32)               # [B, C, 1]

    # ---- glue: zero-pad spatial prompt for the 3x3 / pad=1 conv ---------------
    sp_pad = jnp.pad(spatial_prompt[:, 0], ((0, 0), (1, 1), (1, 1)))  # [B,H+2,W+2]

    # ---- lane-dense view of x / out -------------------------------------------
    x_flat = x.reshape(B, C, H * W)

    wc1_flat = params["wc1"].reshape(hid * 9)      # [hid,1,3,3] -> [hid*9]
    wc2_flat = params["wc2"].reshape(hid * 9)      # [1,hid,3,3] -> [hid*9]

    out_flat = pl.pallas_call(
        _scgate_kernel,
        out_shape=jax.ShapeDtypeStruct((B, C, H * W), jnp.float32),
        grid=(B,),
        in_specs=[
            pl.BlockSpec((None, C, 1), lambda b: (b, 0, 0)),          # gate  (VMEM)
            pl.BlockSpec((None, C, H * W), lambda b: (b, 0, 0)),      # x     (VMEM)
            pl.BlockSpec((None, H + 2, W + 2), lambda b: (b, 0, 0)),  # sp_pad(VMEM)
            pl.BlockSpec(memory_space=pltpu.MemorySpace.SMEM),        # wc1
            pl.BlockSpec(memory_space=pltpu.MemorySpace.SMEM),        # bc1
            pl.BlockSpec(memory_space=pltpu.MemorySpace.SMEM),        # wc2
            pl.BlockSpec(memory_space=pltpu.MemorySpace.SMEM),        # bc2
        ],
        out_specs=pl.BlockSpec((None, C, H * W), lambda b: (b, 0, 0)),
        scratch_shapes=[
            pltpu.VMEM((hid, H + 2, W + 2), jnp.float32),   # zero-bordered intermediate
            pltpu.VMEM((1, H * W), jnp.float32),            # lane-dense spatial result
        ],
        compiler_params=pltpu.CompilerParams(
            dimension_semantics=("parallel",)),
    )(gate3, x_flat, sp_pad, wc1_flat, params["bc1"], wc2_flat, params["bc2"])

    return out_flat.reshape(B, C, H, W)


def scgate_reference(x, spatial_prompt, channel_prompt, params):
    # Pure-JAX reference mirroring the PyTorch forward.
    h = jnp.dot(channel_prompt, params["w1"].T,
                precision=lax.Precision.HIGHEST) + params["b1"]
    h = jax.nn.gelu(h, approximate=False)
    gate = jax.nn.sigmoid(
        jnp.dot(h, params["w2"].T, precision=lax.Precision.HIGHEST)
        + params["b2"])
    dn = ("NCHW", "OIHW", "NCHW")
    s = lax.conv_general_dilated(spatial_prompt, params["wc1"], (1, 1), "SAME",
                                 dimension_numbers=dn,
                                 precision=lax.Precision.HIGHEST)
    s = s + params["bc1"].reshape(1, -1, 1, 1)
    s = lax.conv_general_dilated(s, params["wc2"], (1, 1), "SAME",
                                 dimension_numbers=dn,
                                 precision=lax.Precision.HIGHEST)
    s = s + params["bc2"].reshape(1, 1, 1, 1)
    return x * gate[:, :, None, None] + s + x


if __name__ == "__main__":
    B, C, H, W = 2, 16, 16, 16        # dim = C = 16
    Cp, ratio = 32, 4                 # channel_prompt_dim = 32
    hid = C // ratio                  # int(dim / ratio) = 4

    key = jax.random.PRNGKey(0)
    ks = jax.random.split(key, 11)
    params = {
        "w1":  0.2 * jax.random.normal(ks[0], (hid, Cp), jnp.float32),
        "b1":  0.1 * jax.random.normal(ks[1], (hid,), jnp.float32),
        "w2":  0.2 * jax.random.normal(ks[2], (C, hid), jnp.float32),
        "b2":  0.1 * jax.random.normal(ks[3], (C,), jnp.float32),
        "wc1": 0.2 * jax.random.normal(ks[4], (hid, 1, 3, 3), jnp.float32),
        "bc1": 0.1 * jax.random.normal(ks[5], (hid,), jnp.float32),
        "wc2": 0.2 * jax.random.normal(ks[6], (1, hid, 3, 3), jnp.float32),
        "bc2": 0.1 * jax.random.normal(ks[7], (1,), jnp.float32),
    }
    x = jax.random.normal(ks[8], (B, C, H, W), jnp.float32)
    spatial_prompt = jax.random.normal(ks[9], (B, 1, H, W), jnp.float32)
    channel_prompt = jax.random.normal(ks[10], (B, Cp), jnp.float32)

    out = scgate_forward(x, spatial_prompt, channel_prompt, params)
    out = jax.block_until_ready(out)

    ref = scgate_reference(x, spatial_prompt, channel_prompt, params)
    assert out.shape == ref.shape == (B, C, H, W)
    np.testing.assert_allclose(np.asarray(out), np.asarray(ref),
                               atol=2e-3, rtol=2e-3)
    print("KERNEL_OK")
</pallas_src>

<mosaic_0001>
module attributes {stable_mosaic.version = 11 : i64} {
  func.func @_scgate_kernel(%arg0: i32, %arg1: memref<1x16x1xf32, #tpu.memory_space<vmem>>, %arg2: memref<1x16x256xf32, #tpu.memory_space<vmem>>, %arg3: memref<1x18x18xf32, #tpu.memory_space<vmem>>, %arg4: memref<36xf32, #tpu.memory_space<smem>>, %arg5: memref<4xf32, #tpu.memory_space<smem>>, %arg6: memref<36xf32, #tpu.memory_space<smem>>, %arg7: memref<1xf32, #tpu.memory_space<smem>>, %arg8: memref<1x16x256xf32, #tpu.memory_space<vmem>>, %arg9: memref<4x18x18xf32, #tpu.memory_space<vmem>>, %arg10: memref<1x256xf32, #tpu.memory_space<vmem>>) attributes {dimension_semantics = [#tpu.dimension_semantics<parallel>], iteration_bounds = array<i64: 2>, scalar_prefetch = 0 : i64, scratch_operands = 2 : i64, tpu.core_type = #tpu.core_type<tc>, window_params = [{transform_indices = @transform_0, window_bounds = array<i64: 1, 16, 1>}, {transform_indices = @transform_1, window_bounds = array<i64: 1, 16, 256>}, {transform_indices = @transform_2, window_bounds = array<i64: 1, 18, 18>}, {transform_indices = @transform_3, window_bounds = array<i64: 36>}, {transform_indices = @transform_4, window_bounds = array<i64: 4>}, {transform_indices = @transform_5, window_bounds = array<i64: 36>}, {transform_indices = @transform_6, window_bounds = array<i64: 1>}, {transform_indices = @transform_7, window_bounds = array<i64: 1, 16, 256>}]} {
    %c0 = arith.constant 0 : index
    %c0_0 = arith.constant 0 : index
    %c0_1 = arith.constant 0 : index
    %0 = vector.load %arg3[%c0, %c0_0, %c0_1] : memref<1x18x18xf32, #tpu.memory_space<vmem>>, vector<1x18x18xf32>
    %1 = vector.shape_cast %0 : vector<1x18x18xf32> to vector<18x18xf32>
    %2 = vector.extract_strided_slice %1 {offsets = [0, 0], sizes = [16, 16], strides = [1, 1]} : vector<18x18xf32> to vector<16x16xf32>
    %3 = vector.extract_strided_slice %1 {offsets = [0, 1], sizes = [16, 16], strides = [1, 1]} : vector<18x18xf32> to vector<16x16xf32>
    %4 = vector.extract_strided_slice %1 {offsets = [0, 2], sizes = [16, 16], strides = [1, 1]} : vector<18x18xf32> to vector<16x16xf32>
    %5 = vector.extract_strided_slice %1 {offsets = [1, 0], sizes = [16, 16], strides = [1, 1]} : vector<18x18xf32> to vector<16x16xf32>
    %6 = vector.extract_strided_slice %1 {offsets = [1, 1], sizes = [16, 16], strides = [1, 1]} : vector<18x18xf32> to vector<16x16xf32>
    %7 = vector.extract_strided_slice %1 {offsets = [1, 2], sizes = [16, 16], strides = [1, 1]} : vector<18x18xf32> to vector<16x16xf32>
    %8 = vector.extract_strided_slice %1 {offsets = [2, 0], sizes = [16, 16], strides = [1, 1]} : vector<18x18xf32> to vector<16x16xf32>
    %9 = vector.extract_strided_slice %1 {offsets = [2, 1], sizes = [16, 16], strides = [1, 1]} : vector<18x18xf32> to vector<16x16xf32>
    %10 = vector.extract_strided_slice %1 {offsets = [2, 2], sizes = [16, 16], strides = [1, 1]} : vector<18x18xf32> to vector<16x16xf32>
    %cst = arith.constant 0.000000e+00 : f32
    %11 = vector.broadcast %cst : f32 to vector<4x18x18xf32>
    %c0_2 = arith.constant 0 : index
    %c0_3 = arith.constant 0 : index
    %c0_4 = arith.constant 0 : index
    %12 = vector.load %arg9[%c0_2, %c0_3, %c0_4] : memref<4x18x18xf32, #tpu.memory_space<vmem>>, vector<4x18x18xf32>
    tpu.vector_store %arg9[%c0_2, %c0_3, %c0_4], %11 {strides = array<i32>} : memref<4x18x18xf32, #tpu.memory_space<vmem>>, vector<4x18x18xf32>,
    %cst_5 = arith.constant 0.000000e+00 : f32
    %13 = vector.broadcast %cst_5 : f32 to vector<16x16xf32>
    %c0_6 = arith.constant 0 : index
    %14 = memref.load %arg5[%c0_6] : memref<4xf32, #tpu.memory_space<smem>>
    %15 = vector.broadcast %14 : f32 to vector<16x16xf32>
    %16 = arith.addf %13, %15 : vector<16x16xf32>
    %c0_7 = arith.constant 0 : index
    %17 = memref.load %arg4[%c0_7] : memref<36xf32, #tpu.memory_space<smem>>
    %18 = vector.broadcast %17 : f32 to vector<16x16xf32>
    %19 = arith.mulf %18, %2 : vector<16x16xf32>
    %20 = arith.addf %16, %19 : vector<16x16xf32>
    %c1 = arith.constant 1 : index
    %21 = memref.load %arg4[%c1] : memref<36xf32, #tpu.memory_space<smem>>
    %22 = vector.broadcast %21 : f32 to vector<16x16xf32>
    %23 = arith.mulf %22, %3 : vector<16x16xf32>
    %24 = arith.addf %20, %23 : vector<16x16xf32>
    %c2 = arith.constant 2 : index
    %25 = memref.load %arg4[%c2] : memref<36xf32, #tpu.memory_space<smem>>
    %26 = vector.broadcast %25 : f32 to vector<16x16xf32>
    %27 = arith.mulf %26, %4 : vector<16x16xf32>
    %28 = arith.addf %24, %27 : vector<16x16xf32>
    %c3 = arith.constant 3 : index
    %29 = memref.load %arg4[%c3] : memref<36xf32, #tpu.memory_space<smem>>
    %30 = vector.broadcast %29 : f32 to vector<16x16xf32>
    %31 = arith.mulf %30, %5 : vector<16x16xf32>
    %32 = arith.addf %28, %31 : vector<16x16xf32>
    %c4 = arith.constant 4 : index
    %33 = memref.load %arg4[%c4] : memref<36xf32, #tpu.memory_space<smem>>
    %34 = vector.broadcast %33 : f32 to vector<16x16xf32>
    %35 = arith.mulf %34, %6 : vector<16x16xf32>
    %36 = arith.addf %32, %35 : vector<16x16xf32>
    %c5 = arith.constant 5 : index
    %37 = memref.load %arg4[%c5] : memref<36xf32, #tpu.memory_space<smem>>
    %38 = vector.broadcast %37 : f32 to vector<16x16xf32>
    %39 = arith.mulf %38, %7 : vector<16x16xf32>
    %40 = arith.addf %36, %39 : vector<16x16xf32>
    %c6 = arith.constant 6 : index
    %41 = memref.load %arg4[%c6] : memref<36xf32, #tpu.memory_space<smem>>
    %42 = vector.broadcast %41 : f32 to vector<16x16xf32>
    %43 = arith.mulf %42, %8 : vector<16x16xf32>
    %44 = arith.addf %40, %43 : vector<16x16xf32>
    %c7 = arith.constant 7 : index
    %45 = memref.load %arg4[%c7] : memref<36xf32, #tpu.memory_space<smem>>
    %46 = vector.broadcast %45 : f32 to vector<16x16xf32>
    %47 = arith.mulf %46, %9 : vector<16x16xf32>
    %48 = arith.addf %44, %47 : vector<16x16xf32>
    %c8 = arith.constant 8 : index
    %49 = memref.load %arg4[%c8] : memref<36xf32, #tpu.memory_space<smem>>
    %50 = vector.broadcast %49 : f32 to vector<16x16xf32>
    %51 = arith.mulf %50, %10 : vector<16x16xf32>
    %52 = arith.addf %48, %51 : vector<16x16xf32>
    %c0_8 = arith.constant 0 : index
    %c1_9 = arith.constant 1 : index
    %c1_10 = arith.constant 1 : index
    %53 = vector.load %arg9[%c0_8, %c1_9, %c1_10] : memref<4x18x18xf32, #tpu.memory_space<vmem>>, vector<1x16x16xf32>
    %54 = vector.shape_cast %53 : vector<1x16x16xf32> to vector<16x16xf32>
    %55 = vector.shape_cast %52 : vector<16x16xf32> to vector<1x16x16xf32>
    tpu.vector_store %arg9[%c0_8, %c1_9, %c1_10], %55 {strides = array<i32>} : memref<4x18x18xf32, #tpu.memory_space<vmem>>, vector<1x16x16xf32>,
    %cst_11 = arith.constant 0.000000e+00 : f32
    %56 = vector.broadcast %cst_11 : f32 to vector<16x16xf32>
    %c1_12 = arith.constant 1 : index
    %57 = memref.load %arg5[%c1_12] : memref<4xf32, #tpu.memory_space<smem>>
    %58 = vector.broadcast %57 : f32 to vector<16x16xf32>
    %59 = arith.addf %56, %58 : vector<16x16xf32>
    %c9 = arith.constant 9 : index
    %60 = memref.load %arg4[%c9] : memref<36xf32, #tpu.memory_space<smem>>
    %61 = vector.broadcast %60 : f32 to vector<16x16xf32>
    %62 = arith.mulf %61, %2 : vector<16x16xf32>
    %63 = arith.addf %59, %62 : vector<16x16xf32>
    %c10 = arith.constant 10 : index
    %64 = memref.load %arg4[%c10] : memref<36xf32, #tpu.memory_space<smem>>
    %65 = vector.broadcast %64 : f32 to vector<16x16xf32>
    %66 = arith.mulf %65, %3 : vector<16x16xf32>
    %67 = arith.addf %63, %66 : vector<16x16xf32>
    %c11 = arith.constant 11 : index
    %68 = memref.load %arg4[%c11] : memref<36xf32, #tpu.memory_space<smem>>
    %69 = vector.broadcast %68 : f32 to vector<16x16xf32>
    %70 = arith.mulf %69, %4 : vector<16x16xf32>
    %71 = arith.addf %67, %70 : vector<16x16xf32>
    %c12 = arith.constant 12 : index
    %72 = memref.load %arg4[%c12] : memref<36xf32, #tpu.memory_space<smem>>
    %73 = vector.broadcast %72 : f32 to vector<16x16xf32>
    %74 = arith.mulf %73, %5 : vector<16x16xf32>
    %75 = arith.addf %71, %74 : vector<16x16xf32>
    %c13 = arith.constant 13 : index
    %76 = memref.load %arg4[%c13] : memref<36xf32, #tpu.memory_space<smem>>
    %77 = vector.broadcast %76 : f32 to vector<16x16xf32>
    %78 = arith.mulf %77, %6 : vector<16x16xf32>
    %79 = arith.addf %75, %78 : vector<16x16xf32>
    %c14 = arith.constant 14 : index
    %80 = memref.load %arg4[%c14] : memref<36xf32, #tpu.memory_space<smem>>
    %81 = vector.broadcast %80 : f32 to vector<16x16xf32>
    %82 = arith.mulf %81, %7 : vector<16x16xf32>
    %83 = arith.addf %79, %82 : vector<16x16xf32>
    %c15 = arith.constant 15 : index
    %84 = memref.load %arg4[%c15] : memref<36xf32, #tpu.memory_space<smem>>
    %85 = vector.broadcast %84 : f32 to vector<16x16xf32>
    %86 = arith.mulf %85, %8 : vector<16x16xf32>
    %87 = arith.addf %83, %86 : vector<16x16xf32>
    %c16 = arith.constant 16 : index
    %88 = memref.load %arg4[%c16] : memref<36xf32, #tpu.memory_space<smem>>
    %89 = vector.broadcast %88 : f32 to vector<16x16xf32>
    %90 = arith.mulf %89, %9 : vector<16x16xf32>
    %91 = arith.addf %87, %90 : vector<16x16xf32>
    %c17 = arith.constant 17 : index
    %92 = memref.load %arg4[%c17] : memref<36xf32, #tpu.memory_space<smem>>
    %93 = vector.broadcast %92 : f32 to vector<16x16xf32>
    %94 = arith.mulf %93, %10 : vector<16x16xf32>
    %95 = arith.addf %91, %94 : vector<16x16xf32>
    %c1_13 = arith.constant 1 : index
    %c1_14 = arith.constant 1 : index
    %c1_15 = arith.constant 1 : index
    %96 = vector.load %arg9[%c1_13, %c1_14, %c1_15] : memref<4x18x18xf32, #tpu.memory_space<vmem>>, vector<1x16x16xf32>
    %97 = vector.shape_cast %96 : vector<1x16x16xf32> to vector<16x16xf32>
    %98 = vector.shape_cast %95 : vector<16x16xf32> to vector<1x16x16xf32>
    tpu.vector_store %arg9[%c1_13, %c1_14, %c1_15], %98 {strides = array<i32>} : memref<4x18x18xf32, #tpu.memory_space<vmem>>, vector<1x16x16xf32>,
    %cst_16 = arith.constant 0.000000e+00 : f32
    %99 = vector.broadcast %cst_16 : f32 to vector<16x16xf32>
    %c2_17 = arith.constant 2 : index
    %100 = memref.load %arg5[%c2_17] : memref<4xf32, #tpu.memory_space<smem>>
    %101 = vector.broadcast %100 : f32 to vector<16x16xf32>
    %102 = arith.addf %99, %101 : vector<16x16xf32>
    %c18 = arith.constant 18 : index
    %103 = memref.load %arg4[%c18] : memref<36xf32, #tpu.memory_space<smem>>
    %104 = vector.broadcast %103 : f32 to vector<16x16xf32>
    %105 = arith.mulf %104, %2 : vector<16x16xf32>
    %106 = arith.addf %102, %105 : vector<16x16xf32>
    %c19 = arith.constant 19 : index
    %107 = memref.load %arg4[%c19] : memref<36xf32, #tpu.memory_space<smem>>
    %108 = vector.broadcast %107 : f32 to vector<16x16xf32>
    %109 = arith.mulf %108, %3 : vector<16x16xf32>
    %110 = arith.addf %106, %109 : vector<16x16xf32>
    %c20 = arith.constant 20 : index
    %111 = memref.load %arg4[%c20] : memref<36xf32, #tpu.memory_space<smem>>
    %112 = vector.broadcast %111 : f32 to vector<16x16xf32>
    %113 = arith.mulf %112, %4 : vector<16x16xf32>
    %114 = arith.addf %110, %113 : vector<16x16xf32>
    %c21 = arith.constant 21 : index
    %115 = memref.load %arg4[%c21] : memref<36xf32, #tpu.memory_space<smem>>
    %116 = vector.broadcast %115 : f32 to vector<16x16xf32>
    %117 = arith.mulf %116, %5 : vector<16x16xf32>
    %118 = arith.addf %114, %117 : vector<16x16xf32>
    %c22 = arith.constant 22 : index
    %119 = memref.load %arg4[%c22] : memref<36xf32, #tpu.memory_space<smem>>
    %120 = vector.broadcast %119 : f32 to vector<16x16xf32>
    %121 = arith.mulf %120, %6 : vector<16x16xf32>
    %122 = arith.addf %118, %121 : vector<16x16xf32>
    %c23 = arith.constant 23 : index
    %123 = memref.load %arg4[%c23] : memref<36xf32, #tpu.memory_space<smem>>
    %124 = vector.broadcast %123 : f32 to vector<16x16xf32>
    %125 = arith.mulf %124, %7 : vector<16x16xf32>
    %126 = arith.addf %122, %125 : vector<16x16xf32>
    %c24 = arith.constant 24 : index
    %127 = memref.load %arg4[%c24] : memref<36xf32, #tpu.memory_space<smem>>
    %128 = vector.broadcast %127 : f32 to vector<16x16xf32>
    %129 = arith.mulf %128, %8 : vector<16x16xf32>
    %130 = arith.addf %126, %129 : vector<16x16xf32>
    %c25 = arith.constant 25 : index
    %131 = memref.load %arg4[%c25] : memref<36xf32, #tpu.memory_space<smem>>
    %132 = vector.broadcast %131 : f32 to vector<16x16xf32>
    %133 = arith.mulf %132, %9 : vector<16x16xf32>
    %134 = arith.addf %130, %133 : vector<16x16xf32>
    %c26 = arith.constant 26 : index
    %135 = memref.load %arg4[%c26] : memref<36xf32, #tpu.memory_space<smem>>
    %136 = vector.broadcast %135 : f32 to vector<16x16xf32>
    %137 = arith.mulf %136, %10 : vector<16x16xf32>
    %138 = arith.addf %134, %137 : vector<16x16xf32>
    %c2_18 = arith.constant 2 : index
    %c1_19 = arith.constant 1 : index
    %c1_20 = arith.constant 1 : index
    %139 = vector.load %arg9[%c2_18, %c1_19, %c1_20] : memref<4x18x18xf32, #tpu.memory_space<vmem>>, vector<1x16x16xf32>
    %140 = vector.shape_cast %139 : vector<1x16x16xf32> to vector<16x16xf32>
    %141 = vector.shape_cast %138 : vector<16x16xf32> to vector<1x16x16xf32>
    tpu.vector_store %arg9[%c2_18, %c1_19, %c1_20], %141 {strides = array<i32>} : memref<4x18x18xf32, #tpu.memory_space<vmem>>, vector<1x16x16xf32>,
    %cst_21 = arith.constant 0.000000e+00 : f32
    %142 = vector.broadcast %cst_21 : f32 to vector<16x16xf32>
    %c3_22 = arith.constant 3 : index
    %143 = memref.load %arg5[%c3_22] : memref<4xf32, #tpu.memory_space<smem>>
    %144 = vector.broadcast %143 : f32 to vector<16x16xf32>
    %145 = arith.addf %142, %144 : vector<16x16xf32>
    %c27 = arith.constant 27 : index
    %146 = memref.load %arg4[%c27] : memref<36xf32, #tpu.memory_space<smem>>
    %147 = vector.broadcast %146 : f32 to vector<16x16xf32>
    %148 = arith.mulf %147, %2 : vector<16x16xf32>
    %149 = arith.addf %145, %148 : vector<16x16xf32>
    %c28 = arith.constant 28 : index
    %150 = memref.load %arg4[%c28] : memref<36xf32, #tpu.memory_space<smem>>
    %151 = vector.broadcast %150 : f32 to vector<16x16xf32>
    %152 = arith.mulf %151, %3 : vector<16x16xf32>
    %153 = arith.addf %149, %152 : vector<16x16xf32>
    %c29 = arith.constant 29 : index
    %154 = memref.load %arg4[%c29] : memref<36xf32, #tpu.memory_space<smem>>
    %155 = vector.broadcast %154 : f32 to vector<16x16xf32>
    %156 = arith.mulf %155, %4 : vector<16x16xf32>
    %157 = arith.addf %153, %156 : vector<16x16xf32>
    %c30 = arith.constant 30 : index
    %158 = memref.load %arg4[%c30] : memref<36xf32, #tpu.memory_space<smem>>
    %159 = vector.broadcast %158 : f32 to vector<16x16xf32>
    %160 = arith.mulf %159, %5 : vector<16x16xf32>
    %161 = arith.addf %157, %160 : vector<16x16xf32>
    %c31 = arith.constant 31 : index
    %162 = memref.load %arg4[%c31] : memref<36xf32, #tpu.memory_space<smem>>
    %163 = vector.broadcast %162 : f32 to vector<16x16xf32>
    %164 = arith.mulf %163, %6 : vector<16x16xf32>
    %165 = arith.addf %161, %164 : vector<16x16xf32>
    %c32 = arith.constant 32 : index
    %166 = memref.load %arg4[%c32] : memref<36xf32, #tpu.memory_space<smem>>
    %167 = vector.broadcast %166 : f32 to vector<16x16xf32>
    %168 = arith.mulf %167, %7 : vector<16x16xf32>
    %169 = arith.addf %165, %168 : vector<16x16xf32>
    %c33 = arith.constant 33 : index
    %170 = memref.load %arg4[%c33] : memref<36xf32, #tpu.memory_space<smem>>
    %171 = vector.broadcast %170 : f32 to vector<16x16xf32>
    %172 = arith.mulf %171, %8 : vector<16x16xf32>
    %173 = arith.addf %169, %172 : vector<16x16xf32>
    %c34 = arith.constant 34 : index
    %174 = memref.load %arg4[%c34] : memref<36xf32, #tpu.memory_space<smem>>
    %175 = vector.broadcast %174 : f32 to vector<16x16xf32>
    %176 = arith.mulf %175, %9 : vector<16x16xf32>
    %177 = arith.addf %173, %176 : vector<16x16xf32>
    %c35 = arith.constant 35 : index
    %178 = memref.load %arg4[%c35] : memref<36xf32, #tpu.memory_space<smem>>
    %179 = vector.broadcast %178 : f32 to vector<16x16xf32>
    %180 = arith.mulf %179, %10 : vector<16x16xf32>
    %181 = arith.addf %177, %180 : vector<16x16xf32>
    %c3_23 = arith.constant 3 : index
    %c1_24 = arith.constant 1 : index
    %c1_25 = arith.constant 1 : index
    %182 = vector.load %arg9[%c3_23, %c1_24, %c1_25] : memref<4x18x18xf32, #tpu.memory_space<vmem>>, vector<1x16x16xf32>
    %183 = vector.shape_cast %182 : vector<1x16x16xf32> to vector<16x16xf32>
    %184 = vector.shape_cast %181 : vector<16x16xf32> to vector<1x16x16xf32>
    tpu.vector_store %arg9[%c3_23, %c1_24, %c1_25], %184 {strides = array<i32>} : memref<4x18x18xf32, #tpu.memory_space<vmem>>, vector<1x16x16xf32>,
    %cst_26 = arith.constant 0.000000e+00 : f32
    %185 = vector.broadcast %cst_26 : f32 to vector<16x16xf32>
    %c0_27 = arith.constant 0 : index
    %186 = memref.load %arg7[%c0_27] : memref<1xf32, #tpu.memory_space<smem>>
    %187 = vector.broadcast %186 : f32 to vector<16x16xf32>
    %188 = arith.addf %185, %187 : vector<16x16xf32>
    %c0_28 = arith.constant 0 : index
    %c0_29 = arith.constant 0 : index
    %c0_30 = arith.constant 0 : index
    %189 = vector.load %arg9[%c0_28, %c0_29, %c0_30] : memref<4x18x18xf32, #tpu.memory_space<vmem>>, vector<1x18x18xf32>
    %190 = vector.shape_cast %189 : vector<1x18x18xf32> to vector<18x18xf32>
    %c0_31 = arith.constant 0 : index
    %191 = memref.load %arg6[%c0_31] : memref<36xf32, #tpu.memory_space<smem>>
    %192 = vector.extract_strided_slice %190 {offsets = [0, 0], sizes = [16, 16], strides = [1, 1]} : vector<18x18xf32> to vector<16x16xf32>
    %193 = vector.broadcast %191 : f32 to vector<16x16xf32>
    %194 = arith.mulf %193, %192 : vector<16x16xf32>
    %195 = arith.addf %188, %194 : vector<16x16xf32>
    %c1_32 = arith.constant 1 : index
    %196 = memref.load %arg6[%c1_32] : memref<36xf32, #tpu.memory_space<smem>>
    %197 = vector.extract_strided_slice %190 {offsets = [0, 1], sizes = [16, 16], strides = [1, 1]} : vector<18x18xf32> to vector<16x16xf32>
    %198 = vector.broadcast %196 : f32 to vector<16x16xf32>
    %199 = arith.mulf %198, %197 : vector<16x16xf32>
    %200 = arith.addf %195, %199 : vector<16x16xf32>
    %c2_33 = arith.constant 2 : index
    %201 = memref.load %arg6[%c2_33] : memref<36xf32, #tpu.memory_space<smem>>
    %202 = vector.extract_strided_slice %190 {offsets = [0, 2], sizes = [16, 16], strides = [1, 1]} : vector<18x18xf32> to vector<16x16xf32>
    %203 = vector.broadcast %201 : f32 to vector<16x16xf32>
    %204 = arith.mulf %203, %202 : vector<16x16xf32>
    %205 = arith.addf %200, %204 : vector<16x16xf32>
    %c3_34 = arith.constant 3 : index
    %206 = memref.load %arg6[%c3_34] : memref<36xf32, #tpu.memory_space<smem>>
    %207 = vector.extract_strided_slice %190 {offsets = [1, 0], sizes = [16, 16], strides = [1, 1]} : vector<18x18xf32> to vector<16x16xf32>
    %208 = vector.broadcast %206 : f32 to vector<16x16xf32>
    %209 = arith.mulf %208, %207 : vector<16x16xf32>
    %210 = arith.addf %205, %209 : vector<16x16xf32>
    %c4_35 = arith.constant 4 : index
    %211 = memref.load %arg6[%c4_35] : memref<36xf32, #tpu.memory_space<smem>>
    %212 = vector.extract_strided_slice %190 {offsets = [1, 1], sizes = [16, 16], strides = [1, 1]} : vector<18x18xf32> to vector<16x16xf32>
    %213 = vector.broadcast %211 : f32 to vector<16x16xf32>
    %214 = arith.mulf %213, %212 : vector<16x16xf32>
    %215 = arith.addf %210, %214 : vector<16x16xf32>
    %c5_36 = arith.constant 5 : index
    %216 = memref.load %arg6[%c5_36] : memref<36xf32, #tpu.memory_space<smem>>
    %217 = vector.extract_strided_slice %190 {offsets = [1, 2], sizes = [16, 16], strides = [1, 1]} : vector<18x18xf32> to vector<16x16xf32>
    %218 = vector.broadcast %216 : f32 to vector<16x16xf32>
    %219 = arith.mulf %218, %217 : vector<16x16xf32>
    %220 = arith.addf %215, %219 : vector<16x16xf32>
    %c6_37 = arith.constant 6 : index
    %221 = memref.load %arg6[%c6_37] : memref<36xf32, #tpu.memory_space<smem>>
    %222 = vector.extract_strided_slice %190 {offsets = [2, 0], sizes = [16, 16], strides = [1, 1]} : vector<18x18xf32> to vector<16x16xf32>
    %223 = vector.broadcast %221 : f32 to vector<16x16xf32>
    %224 = arith.mulf %223, %222 : vector<16x16xf32>
    %225 = arith.addf %220, %224 : vector<16x16xf32>
    %c7_38 = arith.constant 7 : index
    %226 = memref.load %arg6[%c7_38] : memref<36xf32, #tpu.memory_space<smem>>
    %227 = vector.extract_strided_slice %190 {offsets = [2, 1], sizes = [16, 16], strides = [1, 1]} : vector<18x18xf32> to vector<16x16xf32>
    %228 = vector.broadcast %226 : f32 to vector<16x16xf32>
    %229 = arith.mulf %228, %227 : vector<16x16xf32>
    %230 = arith.addf %225, %229 : vector<16x16xf32>
    %c8_39 = arith.constant 8 : index
    %231 = memref.load %arg6[%c8_39] : memref<36xf32, #tpu.memory_space<smem>>
    %232 = vector.extract_strided_slice %190 {offsets = [2, 2], sizes = [16, 16], strides = [1, 1]} : vector<18x18xf32> to vector<16x16xf32>
    %233 = vector.broadcast %231 : f32 to vector<16x16xf32>
    %234 = arith.mulf %233, %232 : vector<16x16xf32>
    %235 = arith.addf %230, %234 : vector<16x16xf32>
    %c1_40 = arith.constant 1 : index
    %c0_41 = arith.constant 0 : index
    %c0_42 = arith.constant 0 : index
    %236 = vector.load %arg9[%c1_40, %c0_41, %c0_42] : memref<4x18x18xf32, #tpu.memory_space<vmem>>, vector<1x18x18xf32>
    %237 = vector.shape_cast %236 : vector<1x18x18xf32> to vector<18x18xf32>
    %c9_43 = arith.constant 9 : index
    %238 = memref.load %arg6[%c9_43] : memref<36xf32, #tpu.memory_space<smem>>
    %239 = vector.extract_strided_slice %237 {offsets = [0, 0], sizes = [16, 16], strides = [1, 1]} : vector<18x18xf32> to vector<16x16xf32>
    %240 = vector.broadcast %238 : f32 to vector<16x16xf32>
    %241 = arith.mulf %240, %239 : vector<16x16xf32>
    %242 = arith.addf %235, %241 : vector<16x16xf32>
    %c10_44 = arith.constant 10 : index
    %243 = memref.load %arg6[%c10_44] : memref<36xf32, #tpu.memory_space<smem>>
    %244 = vector.extract_strided_slice %237 {offsets = [0, 1], sizes = [16, 16], strides = [1, 1]} : vector<18x18xf32> to vector<16x16xf32>
    %245 = vector.broadcast %243 : f32 to vector<16x16xf32>
    %246 = arith.mulf %245, %244 : vector<16x16xf32>
    %247 = arith.addf %242, %246 : vector<16x16xf32>
    %c11_45 = arith.constant 11 : index
    %248 = memref.load %arg6[%c11_45] : memref<36xf32, #tpu.memory_space<smem>>
    %249 = vector.extract_strided_slice %237 {offsets = [0, 2], sizes = [16, 16], strides = [1, 1]} : vector<18x18xf32> to vector<16x16xf32>
    %250 = vector.broadcast %248 : f32 to vector<16x16xf32>
    %251 = arith.mulf %250, %249 : vector<16x16xf32>
    %252 = arith.addf %247, %251 : vector<16x16xf32>
    %c12_46 = arith.constant 12 : index
    %253 = memref.load %arg6[%c12_46] : memref<36xf32, #tpu.memory_space<smem>>
    %254 = vector.extract_strided_slice %237 {offsets = [1, 0], sizes = [16, 16], strides = [1, 1]} : vector<18x18xf32> to vector<16x16xf32>
    %255 = vector.broadcast %253 : f32 to vector<16x16xf32>
    %256 = arith.mulf %255, %254 : vector<16x16xf32>
    %257 = arith.addf %252, %256 : vector<16x16xf32>
    %c13_47 = arith.constant 13 : index
    %258 = memref.load %arg6[%c13_47] : memref<36xf32, #tpu.memory_space<smem>>
    %259 = vector.extract_strided_slice %237 {offsets = [1, 1], sizes = [16, 16], strides = [1, 1]} : vector<18x18xf32> to vector<16x16xf32>
    %260 = vector.broadcast %258 : f32 to vector<16x16xf32>
    %261 = arith.mulf %260, %259 : vector<16x16xf32>
    %262 = arith.addf %257, %261 : vector<16x16xf32>
    %c14_48 = arith.constant 14 : index
    %263 = memref.load %arg6[%c14_48] : memref<36xf32, #tpu.memory_space<smem>>
    %264 = vector.extract_strided_slice %237 {offsets = [1, 2], sizes = [16, 16], strides = [1, 1]} : vector<18x18xf32> to vector<16x16xf32>
    %265 = vector.broadcast %263 : f32 to vector<16x16xf32>
    %266 = arith.mulf %265, %264 : vector<16x16xf32>
    %267 = arith.addf %262, %266 : vector<16x16xf32>
    %c15_49 = arith.constant 15 : index
    %268 = memref.load %arg6[%c15_49] : memref<36xf32, #tpu.memory_space<smem>>
    %269 = vector.extract_strided_slice %237 {offsets = [2, 0], sizes = [16, 16], strides = [1, 1]} : vector<18x18xf32> to vector<16x16xf32>
    %270 = vector.broadcast %268 : f32 to vector<16x16xf32>
    %271 = arith.mulf %270, %269 : vector<16x16xf32>
    %272 = arith.addf %267, %271 : vector<16x16xf32>
    %c16_50 = arith.constant 16 : index
    %273 = memref.load %arg6[%c16_50] : memref<36xf32, #tpu.memory_space<smem>>
    %274 = vector.extract_strided_slice %237 {offsets = [2, 1], sizes = [16, 16], strides = [1, 1]} : vector<18x18xf32> to vector<16x16xf32>
    %275 = vector.broadcast %273 : f32 to vector<16x16xf32>
    %276 = arith.mulf %275, %274 : vector<16x16xf32>
    %277 = arith.addf %272, %276 : vector<16x16xf32>
    %c17_51 = arith.constant 17 : index
    %278 = memref.load %arg6[%c17_51] : memref<36xf32, #tpu.memory_space<smem>>
    %279 = vector.extract_strided_slice %237 {offsets = [2, 2], sizes = [16, 16], strides = [1, 1]} : vector<18x18xf32> to vector<16x16xf32>
    %280 = vector.broadcast %278 : f32 to vector<16x16xf32>
    %281 = arith.mulf %280, %279 : vector<16x16xf32>
    %282 = arith.addf %277, %281 : vector<16x16xf32>
    %c2_52 = arith.constant 2 : index
    %c0_53 = arith.constant 0 : index
    %c0_54 = arith.constant 0 : index
    %283 = vector.load %arg9[%c2_52, %c0_53, %c0_54] : memref<4x18x18xf32, #tpu.memory_space<vmem>>, vector<1x18x18xf32>
    %284 = vector.shape_cast %283 : vector<1x18x18xf32> to vector<18x18xf32>
    %c18_55 = arith.constant 18 : index
    %285 = memref.load %arg6[%c18_55] : memref<36xf32, #tpu.memory_space<smem>>
    %286 = vector.extract_strided_slice %284 {offsets = [0, 0], sizes = [16, 16], strides = [1, 1]} : vector<18x18xf32> to vector<16x16xf32>
    %287 = vector.broadcast %285 : f32 to vector<16x16xf32>
    %288 = arith.mulf %287, %286 : vector<16x16xf32>
    %289 = arith.addf %282, %288 : vector<16x16xf32>
    %c19_56 = arith.constant 19 : index
    %290 = memref.load %arg6[%c19_56] : memref<36xf32, #tpu.memory_space<smem>>
    %291 = vector.extract_strided_slice %284 {offsets = [0, 1], sizes = [16, 16], strides = [1, 1]} : vector<18x18xf32> to vector<16x16xf32>
    %292 = vector.broadcast %290 : f32 to vector<16x16xf32>
    %293 = arith.mulf %292, %291 : vector<16x16xf32>
    %294 = arith.addf %289, %293 : vector<16x16xf32>
    %c20_57 = arith.constant 20 : index
    %295 = memref.load %arg6[%c20_57] : memref<36xf32, #tpu.memory_space<smem>>
    %296 = vector.extract_strided_slice %284 {offsets = [0, 2], sizes = [16, 16], strides = [1, 1]} : vector<18x18xf32> to vector<16x16xf32>
    %297 = vector.broadcast %295 : f32 to vector<16x16xf32>
    %298 = arith.mulf %297, %296 : vector<16x16xf32>
    %299 = arith.addf %294, %298 : vector<16x16xf32>
    %c21_58 = arith.constant 21 : index
    %300 = memref.load %arg6[%c21_58] : memref<36xf32, #tpu.memory_space<smem>>
    %301 = vector.extract_strided_slice %284 {offsets = [1, 0], sizes = [16, 16], strides = [1, 1]} : vector<18x18xf32> to vector<16x16xf32>
    %302 = vector.broadcast %300 : f32 to vector<16x16xf32>
    %303 = arith.mulf %302, %301 : vector<16x16xf32>
    %304 = arith.addf %299, %303 : vector<16x16xf32>
    %c22_59 = arith.constant 22 : index
    %305 = memref.load %arg6[%c22_59] : memref<36xf32, #tpu.memory_space<smem>>
    %306 = vector.extract_strided_slice %284 {offsets = [1, 1], sizes = [16, 16], strides = [1, 1]} : vector<18x18xf32> to vector<16x16xf32>
    %307 = vector.broadcast %305 : f32 to vector<16x16xf32>
    %308 = arith.mulf %307, %306 : vector<16x16xf32>
    %309 = arith.addf %304, %308 : vector<16x16xf32>
    %c23_60 = arith.constant 23 : index
    %310 = memref.load %arg6[%c23_60] : memref<36xf32, #tpu.memory_space<smem>>
    %311 = vector.extract_strided_slice %284 {offsets = [1, 2], sizes = [16, 16], strides = [1, 1]} : vector<18x18xf32> to vector<16x16xf32>
    %312 = vector.broadcast %310 : f32 to vector<16x16xf32>
    %313 = arith.mulf %312, %311 : vector<16x16xf32>
    %314 = arith.addf %309, %313 : vector<16x16xf32>
    %c24_61 = arith.constant 24 : index
    %315 = memref.load %arg6[%c24_61] : memref<36xf32, #tpu.memory_space<smem>>
    %316 = vector.extract_strided_slice %284 {offsets = [2, 0], sizes = [16, 16], strides = [1, 1]} : vector<18x18xf32> to vector<16x16xf32>
    %317 = vector.broadcast %315 : f32 to vector<16x16xf32>
    %318 = arith.mulf %317, %316 : vector<16x16xf32>
    %319 = arith.addf %314, %318 : vector<16x16xf32>
    %c25_62 = arith.constant 25 : index
    %320 = memref.load %arg6[%c25_62] : memref<36xf32, #tpu.memory_space<smem>>
    %321 = vector.extract_strided_slice %284 {offsets = [2, 1], sizes = [16, 16], strides = [1, 1]} : vector<18x18xf32> to vector<16x16xf32>
    %322 = vector.broadcast %320 : f32 to vector<16x16xf32>
    %323 = arith.mulf %322, %321 : vector<16x16xf32>
    %324 = arith.addf %319, %323 : vector<16x16xf32>
    %c26_63 = arith.constant 26 : index
    %325 = memref.load %arg6[%c26_63] : memref<36xf32, #tpu.memory_space<smem>>
    %326 = vector.extract_strided_slice %284 {offsets = [2, 2], sizes = [16, 16], strides = [1, 1]} : vector<18x18xf32> to vector<16x16xf32>
    %327 = vector.broadcast %325 : f32 to vector<16x16xf32>
    %328 = arith.mulf %327, %326 : vector<16x16xf32>
    %329 = arith.addf %324, %328 : vector<16x16xf32>
    %c3_64 = arith.constant 3 : index
    %c0_65 = arith.constant 0 : index
    %c0_66 = arith.constant 0 : index
    %330 = vector.load %arg9[%c3_64, %c0_65, %c0_66] : memref<4x18x18xf32, #tpu.memory_space<vmem>>, vector<1x18x18xf32>
    %331 = vector.shape_cast %330 : vector<1x18x18xf32> to vector<18x18xf32>
    %c27_67 = arith.constant 27 : index
    %332 = memref.load %arg6[%c27_67] : memref<36xf32, #tpu.memory_space<smem>>
    %333 = vector.extract_strided_slice %331 {offsets = [0, 0], sizes = [16, 16], strides = [1, 1]} : vector<18x18xf32> to vector<16x16xf32>
    %334 = vector.broadcast %332 : f32 to vector<16x16xf32>
    %335 = arith.mulf %334, %333 : vector<16x16xf32>
    %336 = arith.addf %329, %335 : vector<16x16xf32>
    %c28_68 = arith.constant 28 : index
    %337 = memref.load %arg6[%c28_68] : memref<36xf32, #tpu.memory_space<smem>>
    %338 = vector.extract_strided_slice %331 {offsets = [0, 1], sizes = [16, 16], strides = [1, 1]} : vector<18x18xf32> to vector<16x16xf32>
    %339 = vector.broadcast %337 : f32 to vector<16x16xf32>
    %340 = arith.mulf %339, %338 : vector<16x16xf32>
    %341 = arith.addf %336, %340 : vector<16x16xf32>
    %c29_69 = arith.constant 29 : index
    %342 = memref.load %arg6[%c29_69] : memref<36xf32, #tpu.memory_space<smem>>
    %343 = vector.extract_strided_slice %331 {offsets = [0, 2], sizes = [16, 16], strides = [1, 1]} : vector<18x18xf32> to vector<16x16xf32>
    %344 = vector.broadcast %342 : f32 to vector<16x16xf32>
    %345 = arith.mulf %344, %343 : vector<16x16xf32>
    %346 = arith.addf %341, %345 : vector<16x16xf32>
    %c30_70 = arith.constant 30 : index
    %347 = memref.load %arg6[%c30_70] : memref<36xf32, #tpu.memory_space<smem>>
    %348 = vector.extract_strided_slice %331 {offsets = [1, 0], sizes = [16, 16], strides = [1, 1]} : vector<18x18xf32> to vector<16x16xf32>
    %349 = vector.broadcast %347 : f32 to vector<16x16xf32>
    %350 = arith.mulf %349, %348 : vector<16x16xf32>
    %351 = arith.addf %346, %350 : vector<16x16xf32>
    %c31_71 = arith.constant 31 : index
    %352 = memref.load %arg6[%c31_71] : memref<36xf32, #tpu.memory_space<smem>>
    %353 = vector.extract_strided_slice %331 {offsets = [1, 1], sizes = [16, 16], strides = [1, 1]} : vector<18x18xf32> to vector<16x16xf32>
    %354 = vector.broadcast %352 : f32 to vector<16x16xf32>
    %355 = arith.mulf %354, %353 : vector<16x16xf32>
    %356 = arith.addf %351, %355 : vector<16x16xf32>
    %c32_72 = arith.constant 32 : index
    %357 = memref.load %arg6[%c32_72] : memref<36xf32, #tpu.memory_space<smem>>
    %358 = vector.extract_strided_slice %331 {offsets = [1, 2], sizes = [16, 16], strides = [1, 1]} : vector<18x18xf32> to vector<16x16xf32>
    %359 = vector.broadcast %357 : f32 to vector<16x16xf32>
    %360 = arith.mulf %359, %358 : vector<16x16xf32>
    %361 = arith.addf %356, %360 : vector<16x16xf32>
    %c33_73 = arith.constant 33 : index
    %362 = memref.load %arg6[%c33_73] : memref<36xf32, #tpu.memory_space<smem>>
    %363 = vector.extract_strided_slice %331 {offsets = [2, 0], sizes = [16, 16], strides = [1, 1]} : vector<18x18xf32> to vector<16x16xf32>
    %364 = vector.broadcast %362 : f32 to vector<16x16xf32>
    %365 = arith.mulf %364, %363 : vector<16x16xf32>
    %366 = arith.addf %361, %365 : vector<16x16xf32>
    %c34_74 = arith.constant 34 : index
    %367 = memref.load %arg6[%c34_74] : memref<36xf32, #tpu.memory_space<smem>>
    %368 = vector.extract_strided_slice %331 {offsets = [2, 1], sizes = [16, 16], strides = [1, 1]} : vector<18x18xf32> to vector<16x16xf32>
    %369 = vector.broadcast %367 : f32 to vector<16x16xf32>
    %370 = arith.mulf %369, %368 : vector<16x16xf32>
    %371 = arith.addf %366, %370 : vector<16x16xf32>
    %c35_75 = arith.constant 35 : index
    %372 = memref.load %arg6[%c35_75] : memref<36xf32, #tpu.memory_space<smem>>
    %373 = vector.extract_strided_slice %331 {offsets = [2, 2], sizes = [16, 16], strides = [1, 1]} : vector<18x18xf32> to vector<16x16xf32>
    %374 = vector.broadcast %372 : f32 to vector<16x16xf32>
    %375 = arith.mulf %374, %373 : vector<16x16xf32>
    %376 = arith.addf %371, %375 : vector<16x16xf32>
    %377 = vector.extract_strided_slice %376 {offsets = [0, 0], sizes = [1, 16], strides = [1, 1]} : vector<16x16xf32> to vector<1x16xf32>
    %c0_76 = arith.constant 0 : index
    %c0_77 = arith.constant 0 : index
    %378 = vector.load %arg10[%c0_76, %c0_77] : memref<1x256xf32, #tpu.memory_space<vmem>>, vector<1x16xf32>
    tpu.vector_store %arg10[%c0_76, %c0_77], %377 {strides = array<i32>} : memref<1x256xf32, #tpu.memory_space<vmem>>, vector<1x16xf32>,
    %379 = vector.extract_strided_slice %376 {offsets = [1, 0], sizes = [1, 16], strides = [1, 1]} : vector<16x16xf32> to vector<1x16xf32>
    %c0_78 = arith.constant 0 : index
    %c16_79 = arith.constant 16 : index
    %380 = vector.load %arg10[%c0_78, %c16_79] : memref<1x256xf32, #tpu.memory_space<vmem>>, vector<1x16xf32>
    tpu.vector_store %arg10[%c0_78, %c16_79], %379 {strides = array<i32>} : memref<1x256xf32, #tpu.memory_space<vmem>>, vector<1x16xf32>,
    %381 = vector.extract_strided_slice %376 {offsets = [2, 0], sizes = [1, 16], strides = [1, 1]} : vector<16x16xf32> to vector<1x16xf32>
    %c0_80 = arith.constant 0 : index
    %c32_81 = arith.constant 32 : index
    %382 = vector.load %arg10[%c0_80, %c32_81] : memref<1x256xf32, #tpu.memory_space<vmem>>, vector<1x16xf32>
    tpu.vector_store %arg10[%c0_80, %c32_81], %381 {strides = array<i32>} : memref<1x256xf32, #tpu.memory_space<vmem>>, vector<1x16xf32>,
    %383 = vector.extract_strided_slice %376 {offsets = [3, 0], sizes = [1, 16], strides = [1, 1]} : vector<16x16xf32> to vector<1x16xf32>
    %c0_82 = arith.constant 0 : index
    %c48 = arith.constant 48 : index
    %384 = vector.load %arg10[%c0_82, %c48] : memref<1x256xf32, #tpu.memory_space<vmem>>, vector<1x16xf32>
    tpu.vector_store %arg10[%c0_82, %c48], %383 {strides = array<i32>} : memref<1x256xf32, #tpu.memory_space<vmem>>, vector<1x16xf32>,
    %385 = vector.extract_strided_slice %376 {offsets = [4, 0], sizes = [1, 16], strides = [1, 1]} : vector<16x16xf32> to vector<1x16xf32>
    %c0_83 = arith.constant 0 : index
    %c64 = arith.constant 64 : index
    %386 = vector.load %arg10[%c0_83, %c64] : memref<1x256xf32, #tpu.memory_space<vmem>>, vector<1x16xf32>
    tpu.vector_store %arg10[%c0_83, %c64], %385 {strides = array<i32>} : memref<1x256xf32, #tpu.memory_space<vmem>>, vector<1x16xf32>,
    %387 = vector.extract_strided_slice %376 {offsets = [5, 0], sizes = [1, 16], strides = [1, 1]} : vector<16x16xf32> to vector<1x16xf32>
    %c0_84 = arith.constant 0 : index
    %c80 = arith.constant 80 : index
    %388 = vector.load %arg10[%c0_84, %c80] : memref<1x256xf32, #tpu.memory_space<vmem>>, vector<1x16xf32>
    tpu.vector_store %arg10[%c0_84, %c80], %387 {strides = array<i32>} : memref<1x256xf32, #tpu.memory_space<vmem>>, vector<1x16xf32>,
    %389 = vector.extract_strided_slice %376 {offsets = [6, 0], sizes = [1, 16], strides = [1, 1]} : vector<16x16xf32> to vector<1x16xf32>
    %c0_85 = arith.constant 0 : index
    %c96 = arith.constant 96 : index
    %390 = vector.load %arg10[%c0_85, %c96] : memref<1x256xf32, #tpu.memory_space<vmem>>, vector<1x16xf32>
    tpu.vector_store %arg10[%c0_85, %c96], %389 {strides = array<i32>} : memref<1x256xf32, #tpu.memory_space<vmem>>, vector<1x16xf32>,
    %391 = vector.extract_strided_slice %376 {offsets = [7, 0], sizes = [1, 16], strides = [1, 1]} : vector<16x16xf32> to vector<1x16xf32>
    %c0_86 = arith.constant 0 : index
    %c112 = arith.constant 112 : index
    %392 = vector.load %arg10[%c0_86, %c112] : memref<1x256xf32, #tpu.memory_space<vmem>>, vector<1x16xf32>
    tpu.vector_store %arg10[%c0_86, %c112], %391 {strides = array<i32>} : memref<1x256xf32, #tpu.memory_space<vmem>>, vector<1x16xf32>,
    %393 = vector.extract_strided_slice %376 {offsets = [8, 0], sizes = [1, 16], strides = [1, 1]} : vector<16x16xf32> to vector<1x16xf32>
    %c0_87 = arith.constant 0 : index
    %c128 = arith.constant 128 : index
    %394 = vector.load %arg10[%c0_87, %c128] : memref<1x256xf32, #tpu.memory_space<vmem>>, vector<1x16xf32>
    tpu.vector_store %arg10[%c0_87, %c128], %393 {strides = array<i32>} : memref<1x256xf32, #tpu.memory_space<vmem>>, vector<1x16xf32>,
    %395 = vector.extract_strided_slice %376 {offsets = [9, 0], sizes = [1, 16], strides = [1, 1]} : vector<16x16xf32> to vector<1x16xf32>
    %c0_88 = arith.constant 0 : index
    %c144 = arith.constant 144 : index
    %396 = vector.load %arg10[%c0_88, %c144] : memref<1x256xf32, #tpu.memory_space<vmem>>, vector<1x16xf32>
    tpu.vector_store %arg10[%c0_88, %c144], %395 {strides = array<i32>} : memref<1x256xf32, #tpu.memory_space<vmem>>, vector<1x16xf32>,
    %397 = vector.extract_strided_slice %376 {offsets = [10, 0], sizes = [1, 16], strides = [1, 1]} : vector<16x16xf32> to vector<1x16xf32>
    %c0_89 = arith.constant 0 : index
    %c160 = arith.constant 160 : index
    %398 = vector.load %arg10[%c0_89, %c160] : memref<1x256xf32, #tpu.memory_space<vmem>>, vector<1x16xf32>
    tpu.vector_store %arg10[%c0_89, %c160], %397 {strides = array<i32>} : memref<1x256xf32, #tpu.memory_space<vmem>>, vector<1x16xf32>,
    %399 = vector.extract_strided_slice %376 {offsets = [11, 0], sizes = [1, 16], strides = [1, 1]} : vector<16x16xf32> to vector<1x16xf32>
    %c0_90 = arith.constant 0 : index
    %c176 = arith.constant 176 : index
    %400 = vector.load %arg10[%c0_90, %c176] : memref<1x256xf32, #tpu.memory_space<vmem>>, vector<1x16xf32>
    tpu.vector_store %arg10[%c0_90, %c176], %399 {strides = array<i32>} : memref<1x256xf32, #tpu.memory_space<vmem>>, vector<1x16xf32>,
    %401 = vector.extract_strided_slice %376 {offsets = [12, 0], sizes = [1, 16], strides = [1, 1]} : vector<16x16xf32> to vector<1x16xf32>
    %c0_91 = arith.constant 0 : index
    %c192 = arith.constant 192 : index
    %402 = vector.load %arg10[%c0_91, %c192] : memref<1x256xf32, #tpu.memory_space<vmem>>, vector<1x16xf32>
    tpu.vector_store %arg10[%c0_91, %c192], %401 {strides = array<i32>} : memref<1x256xf32, #tpu.memory_space<vmem>>, vector<1x16xf32>,
    %403 = vector.extract_strided_slice %376 {offsets = [13, 0], sizes = [1, 16], strides = [1, 1]} : vector<16x16xf32> to vector<1x16xf32>
    %c0_92 = arith.constant 0 : index
    %c208 = arith.constant 208 : index
    %404 = vector.load %arg10[%c0_92, %c208] : memref<1x256xf32, #tpu.memory_space<vmem>>, vector<1x16xf32>
    tpu.vector_store %arg10[%c0_92, %c208], %403 {strides = array<i32>} : memref<1x256xf32, #tpu.memory_space<vmem>>, vector<1x16xf32>,
    %405 = vector.extract_strided_slice %376 {offsets = [14, 0], sizes = [1, 16], strides = [1, 1]} : vector<16x16xf32> to vector<1x16xf32>
    %c0_93 = arith.constant 0 : index
    %c224 = arith.constant 224 : index
    %406 = vector.load %arg10[%c0_93, %c224] : memref<1x256xf32, #tpu.memory_space<vmem>>, vector<1x16xf32>
    tpu.vector_store %arg10[%c0_93, %c224], %405 {strides = array<i32>} : memref<1x256xf32, #tpu.memory_space<vmem>>, vector<1x16xf32>,
    %407 = vector.extract_strided_slice %376 {offsets = [15, 0], sizes = [1, 16], strides = [1, 1]} : vector<16x16xf32> to vector<1x16xf32>
    %c0_94 = arith.constant 0 : index
    %c240 = arith.constant 240 : index
    %408 = vector.load %arg10[%c0_94, %c240] : memref<1x256xf32, #tpu.memory_space<vmem>>, vector<1x16xf32>
    tpu.vector_store %arg10[%c0_94, %c240], %407 {strides = array<i32>} : memref<1x256xf32, #tpu.memory_space<vmem>>, vector<1x16xf32>,
    %c0_95 = arith.constant 0 : index
    %c0_96 = arith.constant 0 : index
    %c0_97 = arith.constant 0 : index
    %409 = vector.load %arg2[%c0_95, %c0_96, %c0_97] : memref<1x16x256xf32, #tpu.memory_space<vmem>>, vector<1x16x256xf32>
    %410 = vector.shape_cast %409 : vector<1x16x256xf32> to vector<16x256xf32>
    %c0_98 = arith.constant 0 : index
    %c0_99 = arith.constant 0 : index
    %c0_100 = arith.constant 0 : index
    %411 = vector.load %arg1[%c0_98, %c0_99, %c0_100] : memref<1x16x1xf32, #tpu.memory_space<vmem>>, vector<1x16x1xf32>
    %412 = vector.shape_cast %411 : vector<1x16x1xf32> to vector<16x1xf32>
    %cst_101 = arith.constant 1.000000e+00 : f32
    %413 = vector.broadcast %cst_101 : f32 to vector<16x1xf32>
    %414 = arith.addf %412, %413 : vector<16x1xf32>
    %415 = vector.broadcast %414 : vector<16x1xf32> to vector<16x256xf32>
    %416 = arith.mulf %410, %415 : vector<16x256xf32>
    %c0_102 = arith.constant 0 : index
    %c0_103 = arith.constant 0 : index
    %417 = vector.load %arg10[%c0_102, %c0_103] : memref<1x256xf32, #tpu.memory_space<vmem>>, vector<1x256xf32>
    %418 = vector.broadcast %417 : vector<1x256xf32> to vector<16x256xf32>
    %419 = arith.addf %416, %418 : vector<16x256xf32>
    %c0_104 = arith.constant 0 : index
    %c0_105 = arith.constant 0 : index
    %c0_106 = arith.constant 0 : index
    %420 = vector.load %arg8[%c0_104, %c0_105, %c0_106] : memref<1x16x256xf32, #tpu.memory_space<vmem>>, vector<1x16x256xf32>
    %421 = vector.shape_cast %420 : vector<1x16x256xf32> to vector<16x256xf32>
    %422 = vector.shape_cast %419 : vector<16x256xf32> to vector<1x16x256xf32>
    tpu.vector_store %arg8[%c0_104, %c0_105, %c0_106], %422 {strides = array<i32>} : memref<1x16x256xf32, #tpu.memory_space<vmem>>, vector<1x16x256xf32>,
    return
  }
  func.func @transform_0(%arg0: i32) -> (i32, i32, i32) {
    %c0_i32 = arith.constant 0 : i32
    %c0_i32_0 = arith.constant 0 : i32
    %c0_i32_1 = arith.constant 0 : i32
    return %arg0, %c0_i32, %c0_i32_0 : i32, i32, i32
  }
  func.func @transform_1(%arg0: i32) -> (i32, i32, i32) {
    %c0_i32 = arith.constant 0 : i32
    %c0_i32_0 = arith.constant 0 : i32
    %c0_i32_1 = arith.constant 0 : i32
    return %arg0, %c0_i32, %c0_i32_0 : i32, i32, i32
  }
  func.func @transform_2(%arg0: i32) -> (i32, i32, i32) {
    %c0_i32 = arith.constant 0 : i32
    %c0_i32_0 = arith.constant 0 : i32
    %c0_i32_1 = arith.constant 0 : i32
    return %arg0, %c0_i32, %c0_i32_0 : i32, i32, i32
  }
  func.func @transform_3(%arg0: i32) -> i32 {
    %c0_i32 = arith.constant 0 : i32
    %c0_i32_0 = arith.constant 0 : i32
    return %c0_i32 : i32
  }
  func.func @transform_4(%arg0: i32) -> i32 {
    %c0_i32 = arith.constant 0 : i32
    %c0_i32_0 = arith.constant 0 : i32
    return %c0_i32 : i32
  }
  func.func @transform_5(%arg0: i32) -> i32 {
    %c0_i32 = arith.constant 0 : i32
    %c0_i32_0 = arith.constant 0 : i32
    return %c0_i32 : i32
  }
  func.func @transform_6(%arg0: i32) -> i32 {
    %c0_i32 = arith.constant 0 : i32
    %c0_i32_0 = arith.constant 0 : i32
    return %c0_i32 : i32
  }
  func.func @transform_7(%arg0: i32) -> (i32, i32, i32) {
    %c0_i32 = arith.constant 0 : i32
    %c0_i32_0 = arith.constant 0 : i32
    %c0_i32_1 = arith.constant 0 : i32
    return %arg0, %c0_i32, %c0_i32_0 : i32, i32, i32
  }
}

</mosaic_0001>

<llo_original>
// kernel: tpu_custom_call.1
$region0: #{tpu_custom_call.1}
  #allocation0 [shape = 'u32[]', space=smem, size = 0x4, offset = 0x4, fixed_abs, tag = 'smem constant byte address 0x4 - core index']
  #allocation1 [shape = 'u32[72,128]{1,0:T(1,128)}', space=vmem, size = 0x9000, scoped, tag = 'internal scratch']
  #allocation2 [shape = 'f32[4,18,18]{2,1,0:T(8,128)}', space=vmem, size = 0xc000, scoped, tag = 'scratch operand']
  #allocation3 [shape = 'f32[1,256]{1,0:T(1,128)}', space=vmem, size = 0x400, scoped, tag = 'scratch operand']
  #allocation4 [shape = 'f32[1]{0:T(128)S(6)}', space=smem, size = 0x200, scoped, tag = 'scoped memory for tpu_custom_call.1']
  %s0 = inlined_call_operand.vmem [shape: f32[2,16,1], index: 0, kind: input, shape index: {}]
  %s1 = inlined_call_operand.vmem [shape: f32[2,16,256], index: 1, kind: input, shape index: {}]
  %s2 = inlined_call_operand.vmem [shape: f32[2,18,18], index: 2, kind: input, shape index: {}]
  %s3 = inlined_call_operand.vmem [shape: f32[36], index: 3, kind: input, shape index: {}]
  %s4 = inlined_call_operand.vmem [shape: f32[4], index: 4, kind: input, shape index: {}]
  %s5 = inlined_call_operand.vmem [shape: f32[36], index: 5, kind: input, shape index: {}]
  %s6 = inlined_call_operand.<no memory space> [shape: f32[1], index: 6, kind: input, shape index: {}]
  %s7 = inlined_call_operand.hbm [shape: f32[2,16,256], index: 7, kind: output, shape index: {}]
  %s8 = sld [smem:[#allocation0]]
  $region73: #{tpu_custom_call.1} parent=0
    _
  %s10 = ssub.s32 1, %s8
  %s11 = scalar_select 0, %s10, %s8
  %12 = sst [smem:[#allocation4]] %s6
  $region1: #{tpu_custom_call.1} parent=0
    #allocation5 [shape = 'u8[512]{0}', space=smem, size = 0x200, scoped, tag = 'input window, operand 3, single buffered']
    #allocation6 [shape = 's32[2]{0}', space=sflag, size = 0x8, scoped, tag = 'scoped memory for tpu_custom_call.1']
    #allocation7 [shape = 's32[2]{0}', space=sflag, size = 0x8, scoped, tag = 'scoped memory for tpu_custom_call.1']
    #allocation8 [shape = 'u8[512]{0}', space=smem, size = 0x200, scoped, tag = 'input window, operand 4, single buffered']
    #allocation9 [shape = 's32[1]{0}', space=sflag, size = 0x4, scoped, tag = 'scoped memory for tpu_custom_call.1']
    #allocation10 [shape = 'u8[512]{0}', space=smem, size = 0x200, scoped, tag = 'input window, operand 5, single buffered']
    #allocation11 [shape = 'u8[32768]{0}', space=vmem, size = 0x8000, scoped, tag = 'output window, operand 0']
    %13 = vsyncpa [#allocation7], 0
    %14 = vsyncpa [#allocation9], 0
    %15 = vsyncpa [#allocation6], 0
    %s16 = scalar_lea.sflag [#allocation6], 1
    %17 = vsyncpa %s16, 0
    loop: start=0, step=1, limit=4
    $region2: #{tpu_custom_call.1} parent=1 // loop_pre_header
      _
    $region3: #{tpu_custom_call.1} parent=1 // loop_header
      %s19 = sphi 0, %s23
      %p20 = scmp.ge.s32.totalorder %s19, 4
      %s29 = sphi 0, %s31
      %s32 = sphi 0, %s29
      %s33 = sphi 0, %s32
      %s49 = sphi 0, %s33
      %s55 = sphi 0, %s57
      %s58 = sphi 0, %s55
      %s59 = sphi 0, %s58
      %s75 = sphi 0, %s59
      %s81 = sphi 0, %s83
      %s84 = sphi 0, %s81
      %s85 = sphi 0, %s84
      %s101 = sphi 0, %s85
      %s105 = sphi 0, %s105
      %s107 = sphi 0, %s105
      %s108 = sphi 0, %s107
      %s122 = sphi 0, %s108
      %s126 = sphi 0, %s126
      %s128 = sphi 0, %s126
      %s129 = sphi 0, %s128
      %s143 = sphi 0, %s129
      %s147 = sphi 0, %s147
      %s149 = sphi 0, %s147
      %s150 = sphi 0, %s149
      %s164 = sphi 0, %s150
      %s168 = sphi 0, %s168
      %s170 = sphi 0, %s168
      %s171 = sphi 0, %s170
      %s185 = sphi 0, %s171
      %s191 = sphi 0, %s193
      %s194 = sphi 0, %s191
      %s195 = sphi 0, %s194
      %s211 = sphi 0, %s195
    $region4: #{tpu_custom_call.1} parent=1 // loop_header_branch
      %22 = sbr.rel (%p20) target = $region8
    $region5: #{tpu_custom_call.1} parent=1 // loop_body
      %s24 = ssub.s32 %s19, 1
      %s25 = ssub.s32 %s19, 2
      %s26 = sadd.s32 %s19, 1
      %s27 = ssub.s32 %s19, %s26
      %p28 = scmp.eq.s32.totalorder %s27, 0
      %s30 = sadd.s32 %s29, 1
      %s31 = scalar_select %p28, %s29, %s30
      %p34 = pneg %p28
      %p35 = scmp.eq.s32.totalorder %s19, 1
      %p36 = por %p34, %p35
      %p37 = scmp.ne.s32.totalorder %s29, %s32
      %p38 = scmp.eq.s32.totalorder %s19, 0
      %p39 = por %p37, %p38
      %p40 = scmp.ne.s32.totalorder %s29, %s32
      %p41 = scmp.eq.s32.totalorder %s24, 1
      %p42 = por %p40, %p41
      %p43 = scmp.ne.s32.totalorder %s32, %s33
      %p44 = scmp.eq.s32.totalorder %s24, 0
      %p45 = por %p43, %p44
      %p46 = scmp.ne.s32.totalorder %s32, %s33
      %p47 = scmp.eq.s32.totalorder %s25, 1
      %p48 = por %p46, %p47
      %p50 = scmp.ne.s32.totalorder %s33, %s49
      %p51 = scmp.eq.s32.totalorder %s25, 0
      %p52 = por %p50, %p51
      %s53 = ssub.s32 %s19, %s26
      %p54 = scmp.eq.s32.totalorder %s53, 0
      %s56 = sadd.s32 %s55, 1
      %s57 = scalar_select %p54, %s55, %s56
      %p60 = pneg %p54
      %p61 = scmp.eq.s32.totalorder %s19, 1
      %p62 = por %p60, %p61
      %p63 = scmp.ne.s32.totalorder %s55, %s58
      %p64 = scmp.eq.s32.totalorder %s19, 0
      %p65 = por %p63, %p64
      %p66 = scmp.ne.s32.totalorder %s55, %s58
      %p67 = scmp.eq.s32.totalorder %s24, 1
      %p68 = por %p66, %p67
      %p69 = scmp.ne.s32.totalorder %s58, %s59
      %p70 = scmp.eq.s32.totalorder %s24, 0
      %p71 = por %p69, %p70
      %p72 = scmp.ne.s32.totalorder %s58, %s59
      %p73 = scmp.eq.s32.totalorder %s25, 1
      %p74 = por %p72, %p73
      %p76 = scmp.ne.s32.totalorder %s59, %s75
      %p77 = scmp.eq.s32.totalorder %s25, 0
      %p78 = por %p76, %p77
      %s79 = ssub.s32 %s19, %s26
      %p80 = scmp.eq.s32.totalorder %s79, 0
      %s82 = sadd.s32 %s81, 1
      %s83 = scalar_select %p80, %s81, %s82
      %p86 = pneg %p80
      %p87 = scmp.eq.s32.totalorder %s19, 1
      %p88 = por %p86, %p87
      %p89 = scmp.ne.s32.totalorder %s81, %s84
      %p90 = scmp.eq.s32.totalorder %s19, 0
      %p91 = por %p89, %p90
      %p92 = scmp.ne.s32.totalorder %s81, %s84
      %p93 = scmp.eq.s32.totalorder %s24, 1
      %p94 = por %p92, %p93
      %p95 = scmp.ne.s32.totalorder %s84, %s85
      %p96 = scmp.eq.s32.totalorder %s24, 0
      %p97 = por %p95, %p96
      %p98 = scmp.ne.s32.totalorder %s84, %s85
      %p99 = scmp.eq.s32.totalorder %s25, 1
      %p100 = por %p98, %p99
      %p102 = scmp.ne.s32.totalorder %s85, %s101
      %p103 = scmp.eq.s32.totalorder %s25, 0
      %p104 = por %p102, %p103
      %s106 = sadd.s32 %s105, 1
      %p109 = scmp.eq.s32.totalorder %s19, 1
      %p110 = scmp.ne.s32.totalorder %s105, %s107
      %p111 = scmp.eq.s32.totalorder %s19, 0
      %p112 = por %p110, %p111
      %p113 = scmp.ne.s32.totalorder %s105, %s107
      %p114 = scmp.eq.s32.totalorder %s24, 1
      %p115 = por %p113, %p114
      %p116 = scmp.ne.s32.totalorder %s107, %s108
      %p117 = scmp.eq.s32.totalorder %s24, 0
      %p118 = por %p116, %p117
      %p119 = scmp.ne.s32.totalorder %s107, %s108
      %p120 = scmp.eq.s32.totalorder %s25, 1
      %p121 = por %p119, %p120
      %p123 = scmp.ne.s32.totalorder %s108, %s122
      %p124 = scmp.eq.s32.totalorder %s25, 0
      %p125 = por %p123, %p124
      %s127 = sadd.s32 %s126, 1
      %p130 = scmp.eq.s32.totalorder %s19, 1
      %p131 = scmp.ne.s32.totalorder %s126, %s128
      %p132 = scmp.eq.s32.totalorder %s19, 0
      %p133 = por %p131, %p132
      %p134 = scmp.ne.s32.totalorder %s126, %s128
      %p135 = scmp.eq.s32.totalorder %s24, 1
      %p136 = por %p134, %p135
      %p137 = scmp.ne.s32.totalorder %s128, %s129
      %p138 = scmp.eq.s32.totalorder %s24, 0
      %p139 = por %p137, %p138
      %p140 = scmp.ne.s32.totalorder %s128, %s129
      %p141 = scmp.eq.s32.totalorder %s25, 1
      %p142 = por %p140, %p141
      %p144 = scmp.ne.s32.totalorder %s129, %s143
      %p145 = scmp.eq.s32.totalorder %s25, 0
      %p146 = por %p144, %p145
      %s148 = sadd.s32 %s147, 1
      %p151 = scmp.eq.s32.totalorder %s19, 1
      %p152 = scmp.ne.s32.totalorder %s147, %s149
      %p153 = scmp.eq.s32.totalorder %s19, 0
      %p154 = por %p152, %p153
      %p155 = scmp.ne.s32.totalorder %s147, %s149
      %p156 = scmp.eq.s32.totalorder %s24, 1
      %p157 = por %p155, %p156
      %p158 = scmp.ne.s32.totalorder %s149, %s150
      %p159 = scmp.eq.s32.totalorder %s24, 0
      %p160 = por %p158, %p159
      %p161 = scmp.ne.s32.totalorder %s149, %s150
      %p162 = scmp.eq.s32.totalorder %s25, 1
      %p163 = por %p161, %p162
      %p165 = scmp.ne.s32.totalorder %s150, %s164
      %p166 = scmp.eq.s32.totalorder %s25, 0
      %p167 = por %p165, %p166
      %s169 = sadd.s32 %s168, 1
      %p172 = scmp.eq.s32.totalorder %s19, 1
      %p173 = scmp.ne.s32.totalorder %s168, %s170
      %p174 = scmp.eq.s32.totalorder %s19, 0
      %p175 = por %p173, %p174
      %p176 = scmp.ne.s32.totalorder %s168, %s170
      %p177 = scmp.eq.s32.totalorder %s24, 1
      %p178 = por %p176, %p177
      %p179 = scmp.ne.s32.totalorder %s170, %s171
      %p180 = scmp.eq.s32.totalorder %s24, 0
      %p181 = por %p179, %p180
      %p182 = scmp.ne.s32.totalorder %s170, %s171
      %p183 = scmp.eq.s32.totalorder %s25, 1
      %p184 = por %p182, %p183
      %p186 = scmp.ne.s32.totalorder %s171, %s185
      %p187 = scmp.eq.s32.totalorder %s25, 0
      %p188 = por %p186, %p187
      %s189 = ssub.s32 %s19, %s26
      %p190 = scmp.eq.s32.totalorder %s189, 0
      %s192 = sadd.s32 %s191, 1
      %s193 = scalar_select %p190, %s191, %s192
      %p196 = pneg %p190
      %p197 = scmp.eq.s32.totalorder %s19, 1
      %p198 = por %p196, %p197
      %p199 = scmp.ne.s32.totalorder %s191, %s194
      %p200 = scmp.eq.s32.totalorder %s19, 0
      %p201 = por %p199, %p200
      %p202 = scmp.ne.s32.totalorder %s191, %s194
      %p203 = scmp.eq.s32.totalorder %s24, 1
      %p204 = por %p202, %p203
      %p205 = scmp.ne.s32.totalorder %s194, %s195
      %p206 = scmp.eq.s32.totalorder %s24, 0
      %p207 = por %p205, %p206
      %p208 = scmp.ne.s32.totalorder %s194, %s195
      %p209 = scmp.eq.s32.totalorder %s25, 1
      %p210 = por %p208, %p209
      %p212 = scmp.ne.s32.totalorder %s195, %s211
      %p213 = scmp.eq.s32.totalorder %s25, 0
      %p214 = por %p212, %p213
      %p215 = scmp.le.s32.totalorder 1, %s19
      %p216 = scmp.lt.s32.totalorder %s19, 3
      %p217 = pnand %p215, %p216
      %p218 = pneg %p217
      // Predicated region
      $region9: #{tpu_custom_call.1} parent=5 // pred_check
        _
      $region10: #{tpu_custom_call.1} parent=5 // pred_check_branch
        %220 = sbr.rel (%p217) target = $region12
      $region11: #{tpu_custom_call.1} parent=5 // pred_region
        %s221 = ssub.s32 %s19, 1
        // Predicated region
        $region13: #{tpu_custom_call.1} parent=11 // pred_check
          %p222 = pneg %p118
        $region14: #{tpu_custom_call.1} parent=11 // pred_check_branch
          %224 = sbr.rel (%p222) target = $region16
        $region15: #{tpu_custom_call.1} parent=11 // pred_region
          %226 = vsyncadd [#allocation7], 0
          %s228 = sshll.u32 %s3, 4
          %s229 = int_to_ptr.vmem [resolvable:$true] %s228
          %231 = dma.vmem_to_smem %s229, 16, [#allocation5], [#allocation7]
        $region16: #{tpu_custom_call.1} parent=11 // pred_fallthru
          _
        // Predicated region
        $region17: #{tpu_custom_call.1} parent=11 // pred_check
          %p232 = pneg %p139
        $region18: #{tpu_custom_call.1} parent=11 // pred_check_branch
          %234 = sbr.rel (%p232) target = $region20
        $region19: #{tpu_custom_call.1} parent=11 // pred_region
          %236 = vsyncadd [#allocation9], 0
          %s238 = sshll.u32 %s4, 4
          %s239 = int_to_ptr.vmem [resolvable:$true] %s238
          %241 = dma.vmem_to_smem %s239, 16, [#allocation8], [#allocation9]
        $region20: #{tpu_custom_call.1} parent=11 // pred_fallthru
          _
        // Predicated region
        $region21: #{tpu_custom_call.1} parent=11 // pred_check
          %p242 = pneg %p160
        $region22: #{tpu_custom_call.1} parent=11 // pred_check_branch
          %244 = sbr.rel (%p242) target = $region24
        $region23: #{tpu_custom_call.1} parent=11 // pred_region
          %246 = vsyncadd [#allocation9], 0
          %s248 = sshll.u32 %s5, 4
          %s249 = int_to_ptr.vmem [resolvable:$true] %s248
          %251 = dma.vmem_to_smem %s249, 16, [#allocation10], [#allocation9]
        $region24: #{tpu_custom_call.1} parent=11 // pred_fallthru
          _
        // Predicated region
        $region25: #{tpu_custom_call.1} parent=11 // pred_check
          %p252 = pneg %p181
        $region26: #{tpu_custom_call.1} parent=11 // pred_check_branch
          %254 = sbr.rel (%p252) target = $region28
        $region27: #{tpu_custom_call.1} parent=11 // pred_region
          _
        $region28: #{tpu_custom_call.1} parent=11 // pred_fallthru
          _
      $region12: #{tpu_custom_call.1} parent=5 // pred_fallthru
        _
      %p255 = scmp.lt.s32.totalorder %s19, 2
      // Predicated region
      $region29: #{tpu_custom_call.1} parent=5 // pred_check
        %p256 = pneg %p255
      $region30: #{tpu_custom_call.1} parent=5 // pred_check_branch
        %258 = sbr.rel (%p256) target = $region32
      $region31: #{tpu_custom_call.1} parent=5 // pred_region
        // Predicated region
        $region33: #{tpu_custom_call.1} parent=31 // pred_check
          %p259 = pneg %p39
        $region34: #{tpu_custom_call.1} parent=31 // pred_check_branch
          %261 = sbr.rel (%p259) target = $region36
        $region35: #{tpu_custom_call.1} parent=31 // pred_region
          %p262 = scmp.lt.s32.totalorder %s19, 1
          %s263 = scalar_select %p262, %s19, 1
          %s264 = smul.addr %s263, 2
          %s265 = smul.addr %s264, 8
          %s266 = scalar_lea.vmem %s0, %s265
        $region36: #{tpu_custom_call.1} parent=31 // pred_fallthru
          _
        // Predicated region
        $region37: #{tpu_custom_call.1} parent=31 // pred_check
          %p267 = pneg %p65
        $region38: #{tpu_custom_call.1} parent=31 // pred_check_branch
          %269 = sbr.rel (%p267) target = $region40
        $region39: #{tpu_custom_call.1} parent=31 // pred_region
          %p270 = scmp.lt.s32.totalorder %s19, 1
          %s271 = scalar_select %p270, %s19, 1
          %s272 = smul.addr %s271, 4
          %s273 = smul.addr %s272, 8
          %s274 = scalar_lea.vmem %s1, %s273
        $region40: #{tpu_custom_call.1} parent=31 // pred_fallthru
          _
        // Predicated region
        $region41: #{tpu_custom_call.1} parent=31 // pred_check
          %p275 = pneg %p91
        $region42: #{tpu_custom_call.1} parent=31 // pred_check_branch
          %277 = sbr.rel (%p275) target = $region44
        $region43: #{tpu_custom_call.1} parent=31 // pred_region
          %p278 = scmp.lt.s32.totalorder %s19, 1
          %s279 = scalar_select %p278, %s19, 1
          %s280 = smul.addr %s279, 3
          %s281 = smul.addr %s280, 8
          %s282 = scalar_lea.vmem %s2, %s281
        $region44: #{tpu_custom_call.1} parent=31 // pred_fallthru
          _
      $region32: #{tpu_custom_call.1} parent=5 // pred_fallthru
        _
      %p283 = scmp.le.s32.totalorder 1, %s19
      %p284 = scmp.lt.s32.totalorder %s19, 3
      %p285 = pnand %p283, %p284
      %p286 = pneg %p285
      // Predicated region
      $region45: #{tpu_custom_call.1} parent=5 // pred_check
        _
      $region46: #{tpu_custom_call.1} parent=5 // pred_check_branch
        %288 = sbr.rel (%p285) target = $region48
      $region47: #{tpu_custom_call.1} parent=5 // pred_region
        %s289 = ssub.s32 %s19, 1
        // Predicated region
        $region49: #{tpu_custom_call.1} parent=47 // pred_check
          %p290 = pneg %p118
        $region50: #{tpu_custom_call.1} parent=47 // pred_check_branch
          %292 = sbr.rel (%p290) target = $region52
        $region51: #{tpu_custom_call.1} parent=47 // pred_region
          %294 = dma.done [#allocation7], 16
        $region52: #{tpu_custom_call.1} parent=47 // pred_fallthru
          _
        // Predicated region
        $region53: #{tpu_custom_call.1} parent=47 // pred_check
          %p295 = pneg %p139
        $region54: #{tpu_custom_call.1} parent=47 // pred_check_branch
          %297 = sbr.rel (%p295) target = $region56
        $region55: #{tpu_custom_call.1} parent=47 // pred_region
          %299 = dma.done [#allocation9], 16
        $region56: #{tpu_custom_call.1} parent=47 // pred_fallthru
          _
        // Predicated region
        $region57: #{tpu_custom_call.1} parent=47 // pred_check
          %p300 = pneg %p160
        $region58: #{tpu_custom_call.1} parent=47 // pred_check_branch
          %302 = sbr.rel (%p300) target = $region60
        $region59: #{tpu_custom_call.1} parent=47 // pred_region
          %304 = dma.done [#allocation9], 16
        $region60: #{tpu_custom_call.1} parent=47 // pred_fallthru
          _
        %305 = sfence
        %p306 = scmp.lt.s32.totalorder %s24, 1
        %s307 = scalar_select %p306, %s24, 1
        %s308 = smul.addr %s307, 2
        %s309 = smul.addr %s308, 8
        %s310 = scalar_lea.vmem %s0, %s309
        %p311 = pneg %p45
        %p312 = pneg %p42
        %p313 = scmp.lt.s32.totalorder %s24, 1
        %s314 = scalar_select %p313, %s24, 1
        %s315 = smul.addr %s314, 4
        %s316 = smul.addr %s315, 8
        %s317 = scalar_lea.vmem %s1, %s316
        %p318 = pneg %p71
        %p319 = pneg %p68
        %p320 = scmp.lt.s32.totalorder %s24, 1
        %s321 = scalar_select %p320, %s24, 1
        %s322 = smul.addr %s321, 3
        %s323 = smul.addr %s322, 8
        %s324 = scalar_lea.vmem %s2, %s323
        %p325 = pneg %p97
        %p326 = pneg %p94
        %p327 = pneg %p118
        %p328 = pneg %p115
        %p329 = pneg %p139
        %p330 = pneg %p136
        %p331 = pneg %p160
        %p332 = pneg %p157
        %p333 = pneg %p181
        %p334 = pneg %p178
        %p335 = pneg %p207
        %p336 = pneg %p204
        %s337 = sand.u32 %s194, 1
        %s338 = scalar_lea.sflag [#allocation6], %s337
        %s339 = sand.u32 %s194, 1
        %s340 = smul.addr %s339, 32
        %s341 = scalar_lea.vmem [#allocation11], %s340
        %p342 = scmp.lt.s32.totalorder %s24, 1
        %s343 = scalar_select %p342, %s24, 1
        %s344 = smul.addr %s343, 2
        %s345 = smul.addr %s344, 8
        %s346 = scalar_lea.vmem %s0, %s345
        %p347 = scmp.lt.s32.totalorder %s24, 1
        %s348 = scalar_select %p347, %s24, 1
        %s349 = smul.addr %s348, 4
        %s350 = smul.addr %s349, 8
        %s351 = scalar_lea.vmem %s1, %s350
        %p352 = scmp.lt.s32.totalorder %s24, 1
        %s353 = scalar_select %p352, %s24, 1
        %s354 = smul.addr %s353, 3
        %s355 = smul.addr %s354, 8
        %s356 = scalar_lea.vmem %s2, %s355
        %v357 = vld [vmem:[%s356] sm:$0xff]
        %v358 = vld [vmem:[%s356 + $0x8] sm:$0xff]
        %v359 = vld [vmem:[%s356 + $0x10] sm:$0x3]
        %vm360 = vcmask 146432
        %361 = vst.msk [vmem:[#allocation2] sm:$0xff] %vm360, 0.0
        %362 = vst.msk [vmem:[#allocation2 + $0x8] sm:$0xff] %vm360, 0.0
        %vm363 = vcmask 140288
        %364 = vst.msk [vmem:[#allocation2 + $0x10] sm:$0x3] %vm363, 0.0
        %365 = vst.msk [vmem:[#allocation2 + $0x18] sm:$0xff] %vm360, 0.0
        %366 = vst.msk [vmem:[#allocation2 + $0x20] sm:$0xff] %vm360, 0.0
        %367 = vst.msk [vmem:[#allocation2 + $0x28] sm:$0x3] %vm363, 0.0
        %368 = vst.msk [vmem:[#allocation2 + $0x30] sm:$0xff] %vm360, 0.0
        %369 = vst.msk [vmem:[#allocation2 + $0x38] sm:$0xff] %vm360, 0.0
        %370 = vst.msk [vmem:[#allocation2 + $0x40] sm:$0x3] %vm363, 0.0
        %371 = vst.msk [vmem:[#allocation2 + $0x48] sm:$0xff] %vm360, 0.0
        %372 = vst.msk [vmem:[#allocation2 + $0x50] sm:$0xff] %vm360, 0.0
        %373 = vst.msk [vmem:[#allocation2 + $0x58] sm:$0x3] %vm363, 0.0
        %s374 = sld [smem:[#allocation8]]
        %v375 = vstv %s374
        %v376 = vadd.f32 %v375, 0.0
        %s377 = sld [smem:[#allocation5]]
        %v378 = vstv %s377
        %v379 = vmul.f32 %v378, %v357
        %v380 = vmul.f32 %v378, %v358
        %v381 = vadd.f32 %v376, %v379
        %v382 = vadd.f32 %v376, %v380
        %s383 = sld [smem:[#allocation5 + $0x1]]
        %v384 = vstv %s383
        %v385 = vmul.f32 %v384, %v357
        %v386 = vmul.f32 %v384, %v358
        %389 = vrot.lane.b32.xlu0 %v385, 127
        %v390 = vpop.permute.xlu0 %389
        %391 = vrot.lane.b32.xlu0 %v386, 127
        %v392 = vpop.permute.xlu0 %391
        %v395 = vadd.f32 %v381, %v390
        %v396 = vadd.f32 %v382, %v392
        %s397 = sld [smem:[#allocation5 + $0x2]]
        %v398 = vstv %s397
        %v399 = vmul.f32 %v398, %v357
        %v400 = vmul.f32 %v398, %v358
        %403 = vrot.lane.b32.xlu0 %v399, 126
        %v404 = vpop.permute.xlu0 %403
        %405 = vrot.lane.b32.xlu0 %v400, 126
        %v406 = vpop.permute.xlu0 %405
        %v409 = vadd.f32 %v395, %v404
        %v410 = vadd.f32 %v396, %v406
        %s411 = sld [smem:[#allocation5 + $0x3]]
        %v412 = vstv %s411
        %v413 = vmul.f32 %v412, %v357
        %v414 = vmul.f32 %v412, %v358
        %v415 = vmul.f32 %v412, %v359
        %vm419 = vcmask 1046528
        %v420 = vrot.slane %v413, 1
        %v421 = vrot.slane %v414, 1
        %v422 = vsel %vm419, %v420, %v421
        %v423 = vrot.slane %v415, 1
        %v424 = vsel %vm419, %v421, %v423
        %v427 = vadd.f32 %v409, %v422
        %v428 = vadd.f32 %v410, %v424
        %s429 = sld [smem:[#allocation5 + $0x4]]
        %v430 = vstv %s429
        %v431 = vmul.f32 %v430, %v357
        %v432 = vmul.f32 %v430, %v358
        %v433 = vmul.f32 %v430, %v359
        %v437 = vrot.slane %v431, 1
        %v438 = vrot.slane %v432, 1
        %v439 = vsel %vm419, %v437, %v438
        %v440 = vrot.slane %v433, 1
        %v441 = vsel %vm419, %v438, %v440
        %442 = vrot.lane.b32.xlu0 %v439, 127
        %v443 = vpop.permute.xlu0 %442
        %444 = vrot.lane.b32.xlu0 %v441, 127
        %v445 = vpop.permute.xlu0 %444
        %v448 = vadd.f32 %v427, %v443
        %v449 = vadd.f32 %v428, %v445
        %s450 = sld [smem:[#allocation5 + $0x5]]
        %v451 = vstv %s450
        %v452 = vmul.f32 %v451, %v357
        %v453 = vmul.f32 %v451, %v358
        %v454 = vmul.f32 %v451, %v359
        %v458 = vrot.slane %v452, 1
        %v459 = vrot.slane %v453, 1
        %v460 = vsel %vm419, %v458, %v459
        %v461 = vrot.slane %v454, 1
        %v462 = vsel %vm419, %v459, %v461
        %463 = vrot.lane.b32.xlu0 %v460, 126
        %v464 = vpop.permute.xlu0 %463
        %465 = vrot.lane.b32.xlu0 %v462, 126
        %v466 = vpop.permute.xlu0 %465
        %v469 = vadd.f32 %v448, %v464
        %v470 = vadd.f32 %v449, %v466
        %s471 = sld [smem:[#allocation5 + $0x6]]
        %v472 = vstv %s471
        %v473 = vmul.f32 %v472, %v357
        %v474 = vmul.f32 %v472, %v358
        %v475 = vmul.f32 %v472, %v359
        %vm479 = vcmask 1045504
        %v480 = vrot.slane %v473, 2
        %v481 = vrot.slane %v474, 2
        %v482 = vsel %vm479, %v480, %v481
        %v483 = vrot.slane %v475, 2
        %v484 = vsel %vm479, %v481, %v483
        %v487 = vadd.f32 %v469, %v482
        %v488 = vadd.f32 %v470, %v484
        %s489 = sld [smem:[#allocation5 + $0x7]]
        %v490 = vstv %s489
        %v491 = vmul.f32 %v490, %v357
        %v492 = vmul.f32 %v490, %v358
        %v493 = vmul.f32 %v490, %v359
        %v497 = vrot.slane %v491, 2
        %v498 = vrot.slane %v492, 2
        %v499 = vsel %vm479, %v497, %v498
        %v500 = vrot.slane %v493, 2
        %v501 = vsel %vm479, %v498, %v500
        %502 = vrot.lane.b32.xlu0 %v499, 127
        %v503 = vpop.permute.xlu0 %502
        %504 = vrot.lane.b32.xlu0 %v501, 127
        %v505 = vpop.permute.xlu0 %504
        %v508 = vadd.f32 %v487, %v503
        %v509 = vadd.f32 %v488, %v505
        %s510 = sld [smem:[#allocation5 + $0x8]]
        %v511 = vstv %s510
        %v512 = vmul.f32 %v511, %v357
        %v513 = vmul.f32 %v511, %v358
        %v514 = vmul.f32 %v511, %v359
        %v518 = vrot.slane %v512, 2
        %v519 = vrot.slane %v513, 2
        %v520 = vsel %vm479, %v518, %v519
        %v521 = vrot.slane %v514, 2
        %v522 = vsel %vm479, %v519, %v521
        %523 = vrot.lane.b32.xlu0 %v520, 126
        %v524 = vpop.permute.xlu0 %523
        %525 = vrot.lane.b32.xlu0 %v522, 126
        %v526 = vpop.permute.xlu0 %525
        %v529 = vadd.f32 %v508, %v524
        %v530 = vadd.f32 %v509, %v526
        %533 = vrot.lane.b32.xlu0 %v529, 1
        %v534 = vpop.permute.xlu0 %533
        %535 = vrot.lane.b32.xlu0 %v530, 1
        %v536 = vpop.permute.xlu0 %535
        %vm539 = vcmask 138248
        %540 = vst.msk [vmem:[#allocation2 + $0x1] sm:$0xff] %vm539, %v534
        %541 = vst.msk [vmem:[#allocation2 + $0x9] sm:$0xff] %vm539, %v536
        %s542 = sld [smem:[#allocation8 + $0x1]]
        %v543 = vstv %s542
        %v544 = vadd.f32 %v543, 0.0
        %s545 = sld [smem:[#allocation5 + $0x9]]
        %v546 = vstv %s545
        %v547 = vmul.f32 %v546, %v357
        %v548 = vmul.f32 %v546, %v358
        %v549 = vadd.f32 %v544, %v547
        %v550 = vadd.f32 %v544, %v548
        %s551 = sld [smem:[#allocation5 + $0xa]]
        %v552 = vstv %s551
        %v553 = vmul.f32 %v552, %v357
        %v554 = vmul.f32 %v552, %v358
        %557 = vrot.lane.b32.xlu0 %v553, 127
        %v558 = vpop.permute.xlu0 %557
        %559 = vrot.lane.b32.xlu0 %v554, 127
        %v560 = vpop.permute.xlu0 %559
        %v563 = vadd.f32 %v549, %v558
        %v564 = vadd.f32 %v550, %v560
        %s565 = sld [smem:[#allocation5 + $0xb]]
        %v566 = vstv %s565
        %v567 = vmul.f32 %v566, %v357
        %v568 = vmul.f32 %v566, %v358
        %571 = vrot.lane.b32.xlu0 %v567, 126
        %v572 = vpop.permute.xlu0 %571
        %573 = vrot.lane.b32.xlu0 %v568, 126
        %v574 = vpop.permute.xlu0 %573
        %v577 = vadd.f32 %v563, %v572
        %v578 = vadd.f32 %v564, %v574
        %s579 = sld [smem:[#allocation5 + $0xc]]
        %v580 = vstv %s579
        %v581 = vmul.f32 %v580, %v357
        %v582 = vmul.f32 %v580, %v358
        %v583 = vmul.f32 %v580, %v359
        %v587 = vrot.slane %v581, 1
        %v588 = vrot.slane %v582, 1
        %v589 = vsel %vm419, %v587, %v588
        %v590 = vrot.slane %v583, 1
        %v591 = vsel %vm419, %v588, %v590
        %v594 = vadd.f32 %v577, %v589
        %v595 = vadd.f32 %v578, %v591
        %s596 = sld [smem:[#allocation5 + $0xd]]
        %v597 = vstv %s596
        %v598 = vmul.f32 %v597, %v357
        %v599 = vmul.f32 %v597, %v358
        %v600 = vmul.f32 %v597, %v359
        %v604 = vrot.slane %v598, 1
        %v605 = vrot.slane %v599, 1
        %v606 = vsel %vm419, %v604, %v605
        %v607 = vrot.slane %v600, 1
        %v608 = vsel %vm419, %v605, %v607
        %609 = vrot.lane.b32.xlu0 %v606, 127
        %v610 = vpop.permute.xlu0 %609
        %611 = vrot.lane.b32.xlu0 %v608, 127
        %v612 = vpop.permute.xlu0 %611
        %v615 = vadd.f32 %v594, %v610
        %v616 = vadd.f32 %v595, %v612
        %s617 = sld [smem:[#allocation5 + $0xe]]
        %v618 = vstv %s617
        %v619 = vmul.f32 %v618, %v357
        %v620 = vmul.f32 %v618, %v358
        %v621 = vmul.f32 %v618, %v359
        %v625 = vrot.slane %v619, 1
        %v626 = vrot.slane %v620, 1
        %v627 = vsel %vm419, %v625, %v626
        %v628 = vrot.slane %v621, 1
        %v629 = vsel %vm419, %v626, %v628
        %630 = vrot.lane.b32.xlu0 %v627, 126
        %v631 = vpop.permute.xlu0 %630
        %632 = vrot.lane.b32.xlu0 %v629, 126
        %v633 = vpop.permute.xlu0 %632
        %v636 = vadd.f32 %v615, %v631
        %v637 = vadd.f32 %v616, %v633
        %s638 = sld [smem:[#allocation5 + $0xf]]
        %v639 = vstv %s638
        %v640 = vmul.f32 %v639, %v357
        %v641 = vmul.f32 %v639, %v358
        %v642 = vmul.f32 %v639, %v359
        %v646 = vrot.slane %v640, 2
        %v647 = vrot.slane %v641, 2
        %v648 = vsel %vm479, %v646, %v647
        %v649 = vrot.slane %v642, 2
        %v650 = vsel %vm479, %v647, %v649
        %v653 = vadd.f32 %v636, %v648
        %v654 = vadd.f32 %v637, %v650
        %s655 = sld [smem:[#allocation5 + $0x10]]
        %v656 = vstv %s655
        %v657 = vmul.f32 %v656, %v357
        %v658 = vmul.f32 %v656, %v358
        %v659 = vmul.f32 %v656, %v359
        %v663 = vrot.slane %v657, 2
        %v664 = vrot.slane %v658, 2
        %v665 = vsel %vm479, %v663, %v664
        %v666 = vrot.slane %v659, 2
        %v667 = vsel %vm479, %v664, %v666
        %668 = vrot.lane.b32.xlu0 %v665, 127
        %v669 = vpop.permute.xlu0 %668
        %670 = vrot.lane.b32.xlu0 %v667, 127
        %v671 = vpop.permute.xlu0 %670
        %v674 = vadd.f32 %v653, %v669
        %v675 = vadd.f32 %v654, %v671
        %s676 = sld [smem:[#allocation5 + $0x11]]
        %v677 = vstv %s676
        %v678 = vmul.f32 %v677, %v357
        %v679 = vmul.f32 %v677, %v358
        %v680 = vmul.f32 %v677, %v359
        %v684 = vrot.slane %v678, 2
        %v685 = vrot.slane %v679, 2
        %v686 = vsel %vm479, %v684, %v685
        %v687 = vrot.slane %v680, 2
        %v688 = vsel %vm479, %v685, %v687
        %689 = vrot.lane.b32.xlu0 %v686, 126
        %v690 = vpop.permute.xlu0 %689
        %691 = vrot.lane.b32.xlu0 %v688, 126
        %v692 = vpop.permute.xlu0 %691
        %v695 = vadd.f32 %v674, %v690
        %v696 = vadd.f32 %v675, %v692
        %699 = vrot.lane.b32.xlu0 %v695, 1
        %v700 = vpop.permute.xlu0 %699
        %701 = vrot.lane.b32.xlu0 %v696, 1
        %v702 = vpop.permute.xlu0 %701
        %s705 = scalar_lea.vmem [#allocation2], 24
        %706 = vst.msk [vmem:[%s705 + $0x1] sm:$0xff] %vm539, %v700
        %707 = vst.msk [vmem:[%s705 + $0x9] sm:$0xff] %vm539, %v702
        %s708 = sld [smem:[#allocation8 + $0x2]]
        %v709 = vstv %s708
        %v710 = vadd.f32 %v709, 0.0
        %s711 = sld [smem:[#allocation5 + $0x12]]
        %v712 = vstv %s711
        %v713 = vmul.f32 %v712, %v357
        %v714 = vmul.f32 %v712, %v358
        %v715 = vadd.f32 %v710, %v713
        %v716 = vadd.f32 %v710, %v714
        %s717 = sld [smem:[#allocation5 + $0x13]]
        %v718 = vstv %s717
        %v719 = vmul.f32 %v718, %v357
        %v720 = vmul.f32 %v718, %v358
        %723 = vrot.lane.b32.xlu0 %v719, 127
        %v724 = vpop.permute.xlu0 %723
        %725 = vrot.lane.b32.xlu0 %v720, 127
        %v726 = vpop.permute.xlu0 %725
        %v729 = vadd.f32 %v715, %v724
        %v730 = vadd.f32 %v716, %v726
        %s731 = sld [smem:[#allocation5 + $0x14]]
        %v732 = vstv %s731
        %v733 = vmul.f32 %v732, %v357
        %v734 = vmul.f32 %v732, %v358
        %737 = vrot.lane.b32.xlu0 %v733, 126
        %v738 = vpop.permute.xlu0 %737
        %739 = vrot.lane.b32.xlu0 %v734, 126
        %v740 = vpop.permute.xlu0 %739
        %v743 = vadd.f32 %v729, %v738
        %v744 = vadd.f32 %v730, %v740
        %s745 = sld [smem:[#allocation5 + $0x15]]
        %v746 = vstv %s745
        %v747 = vmul.f32 %v746, %v357
        %v748 = vmul.f32 %v746, %v358
        %v749 = vmul.f32 %v746, %v359
        %v753 = vrot.slane %v747, 1
        %v754 = vrot.slane %v748, 1
        %v755 = vsel %vm419, %v753, %v754
        %v756 = vrot.slane %v749, 1
        %v757 = vsel %vm419, %v754, %v756
        %v760 = vadd.f32 %v743, %v755
        %v761 = vadd.f32 %v744, %v757
        %s762 = sld [smem:[#allocation5 + $0x16]]
        %v763 = vstv %s762
        %v764 = vmul.f32 %v763, %v357
        %v765 = vmul.f32 %v763, %v358
        %v766 = vmul.f32 %v763, %v359
        %v770 = vrot.slane %v764, 1
        %v771 = vrot.slane %v765, 1
        %v772 = vsel %vm419, %v770, %v771
        %v773 = vrot.slane %v766, 1
        %v774 = vsel %vm419, %v771, %v773
        %775 = vrot.lane.b32.xlu0 %v772, 127
        %v776 = vpop.permute.xlu0 %775
        %777 = vrot.lane.b32.xlu0 %v774, 127
        %v778 = vpop.permute.xlu0 %777
        %v781 = vadd.f32 %v760, %v776
        %v782 = vadd.f32 %v761, %v778
        %s783 = sld [smem:[#allocation5 + $0x17]]
        %v784 = vstv %s783
        %v785 = vmul.f32 %v784, %v357
        %v786 = vmul.f32 %v784, %v358
        %v787 = vmul.f32 %v784, %v359
        %v791 = vrot.slane %v785, 1
        %v792 = vrot.slane %v786, 1
        %v793 = vsel %vm419, %v791, %v792
        %v794 = vrot.slane %v787, 1
        %v795 = vsel %vm419, %v792, %v794
        %796 = vrot.lane.b32.xlu0 %v793, 126
        %v797 = vpop.permute.xlu0 %796
        %798 = vrot.lane.b32.xlu0 %v795, 126
        %v799 = vpop.permute.xlu0 %798
        %v802 = vadd.f32 %v781, %v797
        %v803 = vadd.f32 %v782, %v799
        %s804 = sld [smem:[#allocation5 + $0x18]]
        %v805 = vstv %s804
        %v806 = vmul.f32 %v805, %v357
        %v807 = vmul.f32 %v805, %v358
        %v808 = vmul.f32 %v805, %v359
        %v812 = vrot.slane %v806, 2
        %v813 = vrot.slane %v807, 2
        %v814 = vsel %vm479, %v812, %v813
        %v815 = vrot.slane %v808, 2
        %v816 = vsel %vm479, %v813, %v815
        %v819 = vadd.f32 %v802, %v814
        %v820 = vadd.f32 %v803, %v816
        %s821 = sld [smem:[#allocation5 + $0x19]]
        %v822 = vstv %s821
        %v823 = vmul.f32 %v822, %v357
        %v824 = vmul.f32 %v822, %v358
        %v825 = vmul.f32 %v822, %v359
        %v829 = vrot.slane %v823, 2
        %v830 = vrot.slane %v824, 2
        %v831 = vsel %vm479, %v829, %v830
        %v832 = vrot.slane %v825, 2
        %v833 = vsel %vm479, %v830, %v832
        %834 = vrot.lane.b32.xlu0 %v831, 127
        %v835 = vpop.permute.xlu0 %834
        %836 = vrot.lane.b32.xlu0 %v833, 127
        %v837 = vpop.permute.xlu0 %836
        %v840 = vadd.f32 %v819, %v835
        %v841 = vadd.f32 %v820, %v837
        %s842 = sld [smem:[#allocation5 + $0x1a]]
        %v843 = vstv %s842
        %v844 = vmul.f32 %v843, %v357
        %v845 = vmul.f32 %v843, %v358
        %v846 = vmul.f32 %v843, %v359
        %v850 = vrot.slane %v844, 2
        %v851 = vrot.slane %v845, 2
        %v852 = vsel %vm479, %v850, %v851
        %v853 = vrot.slane %v846, 2
        %v854 = vsel %vm479, %v851, %v853
        %855 = vrot.lane.b32.xlu0 %v852, 126
        %v856 = vpop.permute.xlu0 %855
        %857 = vrot.lane.b32.xlu0 %v854, 126
        %v858 = vpop.permute.xlu0 %857
        %v861 = vadd.f32 %v840, %v856
        %v862 = vadd.f32 %v841, %v858
        %865 = vrot.lane.b32.xlu0 %v861, 1
        %v866 = vpop.permute.xlu0 %865
        %867 = vrot.lane.b32.xlu0 %v862, 1
        %v868 = vpop.permute.xlu0 %867
        %s871 = scalar_lea.vmem [#allocation2], 48
        %872 = vst.msk [vmem:[%s871 + $0x1] sm:$0xff] %vm539, %v866
        %873 = vst.msk [vmem:[%s871 + $0x9] sm:$0xff] %vm539, %v868
        %s874 = sld [smem:[#allocation8 + $0x3]]
        %v875 = vstv %s874
        %v876 = vadd.f32 %v875, 0.0
        %s877 = sld [smem:[#allocation5 + $0x1b]]
        %v878 = vstv %s877
        %v879 = vmul.f32 %v878, %v357
        %v880 = vmul.f32 %v878, %v358
        %v881 = vadd.f32 %v876, %v879
        %v882 = vadd.f32 %v876, %v880
        %s883 = sld [smem:[#allocation5 + $0x1c]]
        %v884 = vstv %s883
        %v885 = vmul.f32 %v884, %v357
        %v886 = vmul.f32 %v884, %v358
        %889 = vrot.lane.b32.xlu0 %v885, 127
        %v890 = vpop.permute.xlu0 %889
        %891 = vrot.lane.b32.xlu0 %v886, 127
        %v892 = vpop.permute.xlu0 %891
        %v895 = vadd.f32 %v881, %v890
        %v896 = vadd.f32 %v882, %v892
        %s897 = sld [smem:[#allocation5 + $0x1d]]
        %v898 = vstv %s897
        %v899 = vmul.f32 %v898, %v357
        %v900 = vmul.f32 %v898, %v358
        %903 = vrot.lane.b32.xlu0 %v899, 126
        %v904 = vpop.permute.xlu0 %903
        %905 = vrot.lane.b32.xlu0 %v900, 126
        %v906 = vpop.permute.xlu0 %905
        %v909 = vadd.f32 %v895, %v904
        %v910 = vadd.f32 %v896, %v906
        %s911 = sld [smem:[#allocation5 + $0x1e]]
        %v912 = vstv %s911
        %v913 = vmul.f32 %v912, %v357
        %v914 = vmul.f32 %v912, %v358
        %v915 = vmul.f32 %v912, %v359
        %v919 = vrot.slane %v913, 1
        %v920 = vrot.slane %v914, 1
        %v921 = vsel %vm419, %v919, %v920
        %v922 = vrot.slane %v915, 1
        %v923 = vsel %vm419, %v920, %v922
        %v926 = vadd.f32 %v909, %v921
        %v927 = vadd.f32 %v910, %v923
        %s928 = sld [smem:[#allocation5 + $0x1f]]
        %v929 = vstv %s928
        %v930 = vmul.f32 %v929, %v357
        %v931 = vmul.f32 %v929, %v358
        %v932 = vmul.f32 %v929, %v359
        %v936 = vrot.slane %v930, 1
        %v937 = vrot.slane %v931, 1
        %v938 = vsel %vm419, %v936, %v937
        %v939 = vrot.slane %v932, 1
        %v940 = vsel %vm419, %v937, %v939
        %941 = vrot.lane.b32.xlu0 %v938, 127
        %v942 = vpop.permute.xlu0 %941
        %943 = vrot.lane.b32.xlu0 %v940, 127
        %v944 = vpop.permute.xlu0 %943
        %v947 = vadd.f32 %v926, %v942
        %v948 = vadd.f32 %v927, %v944
        %s949 = sld [smem:[#allocation5 + $0x20]]
        %v950 = vstv %s949
        %v951 = vmul.f32 %v950, %v357
        %v952 = vmul.f32 %v950, %v358
        %v953 = vmul.f32 %v950, %v359
        %v957 = vrot.slane %v951, 1
        %v958 = vrot.slane %v952, 1
        %v959 = vsel %vm419, %v957, %v958
        %v960 = vrot.slane %v953, 1
        %v961 = vsel %vm419, %v958, %v960
        %962 = vrot.lane.b32.xlu0 %v959, 126
        %v963 = vpop.permute.xlu0 %962
        %964 = vrot.lane.b32.xlu0 %v961, 126
        %v965 = vpop.permute.xlu0 %964
        %v968 = vadd.f32 %v947, %v963
        %v969 = vadd.f32 %v948, %v965
        %s970 = sld [smem:[#allocation5 + $0x21]]
        %v971 = vstv %s970
        %v972 = vmul.f32 %v971, %v357
        %v973 = vmul.f32 %v971, %v358
        %v974 = vmul.f32 %v971, %v359
        %v978 = vrot.slane %v972, 2
        %v979 = vrot.slane %v973, 2
        %v980 = vsel %vm479, %v978, %v979
        %v981 = vrot.slane %v974, 2
        %v982 = vsel %vm479, %v979, %v981
        %v985 = vadd.f32 %v968, %v980
        %v986 = vadd.f32 %v969, %v982
        %s987 = sld [smem:[#allocation5 + $0x22]]
        %v988 = vstv %s987
        %v989 = vmul.f32 %v988, %v357
        %v990 = vmul.f32 %v988, %v358
        %v991 = vmul.f32 %v988, %v359
        %v995 = vrot.slane %v989, 2
        %v996 = vrot.slane %v990, 2
        %v997 = vsel %vm479, %v995, %v996
        %v998 = vrot.slane %v991, 2
        %v999 = vsel %vm479, %v996, %v998
        %1000 = vrot.lane.b32.xlu0 %v997, 127
        %v1001 = vpop.permute.xlu0 %1000
        %1002 = vrot.lane.b32.xlu0 %v999, 127
        %v1003 = vpop.permute.xlu0 %1002
        %v1006 = vadd.f32 %v985, %v1001
        %v1007 = vadd.f32 %v986, %v1003
        %s1008 = sld [smem:[#allocation5 + $0x23]]
        %v1009 = vstv %s1008
        %v1010 = vmul.f32 %v1009, %v357
        %v1011 = vmul.f32 %v1009, %v358
        %v1012 = vmul.f32 %v1009, %v359
        %v1016 = vrot.slane %v1010, 2
        %v1017 = vrot.slane %v1011, 2
        %v1018 = vsel %vm479, %v1016, %v1017
        %v1019 = vrot.slane %v1012, 2
        %v1020 = vsel %vm479, %v1017, %v1019
        %1021 = vrot.lane.b32.xlu0 %v1018, 126
        %v1022 = vpop.permute.xlu0 %1021
        %1023 = vrot.lane.b32.xlu0 %v1020, 126
        %v1024 = vpop.permute.xlu0 %1023
        %v1027 = vadd.f32 %v1006, %v1022
        %v1028 = vadd.f32 %v1007, %v1024
        %1031 = vrot.lane.b32.xlu0 %v1027, 1
        %v1032 = vpop.permute.xlu0 %1031
        %1033 = vrot.lane.b32.xlu0 %v1028, 1
        %v1034 = vpop.permute.xlu0 %1033
        %s1037 = scalar_lea.vmem [#allocation2], 72
        %1038 = vst.msk [vmem:[%s1037 + $0x1] sm:$0xff] %vm539, %v1032
        %1039 = vst.msk [vmem:[%s1037 + $0x9] sm:$0xff] %vm539, %v1034
        %s1040 = sld [smem:[#allocation4]]
        %v1041 = vstv %s1040
        %v1042 = vadd.f32 %v1041, 0.0
        %v1043 = vld [vmem:[#allocation2] sm:$0xff]
        %v1044 = vld [vmem:[#allocation2 + $0x8] sm:$0xff]
        %v1045 = vld [vmem:[#allocation2 + $0x10] sm:$0x3]
        %s1046 = sld [smem:[#allocation10]]
        %v1047 = vstv %s1046
        %v1048 = vmul.f32 %v1047, %v1043
        %v1049 = vmul.f32 %v1047, %v1044
        %v1050 = vadd.f32 %v1042, %v1048
        %v1051 = vadd.f32 %v1042, %v1049
        %s1052 = sld [smem:[#allocation10 + $0x1]]
        %v1053 = vstv %s1052
        %v1054 = vmul.f32 %v1053, %v1043
        %v1055 = vmul.f32 %v1053, %v1044
        %1058 = vrot.lane.b32.xlu0 %v1054, 127
        %v1059 = vpop.permute.xlu0 %1058
        %1060 = vrot.lane.b32.xlu0 %v1055, 127
        %v1061 = vpop.permute.xlu0 %1060
        %v1064 = vadd.f32 %v1050, %v1059
        %v1065 = vadd.f32 %v1051, %v1061
        %s1066 = sld [smem:[#allocation10 + $0x2]]
        %v1067 = vstv %s1066
        %v1068 = vmul.f32 %v1067, %v1043
        %v1069 = vmul.f32 %v1067, %v1044
        %1072 = vrot.lane.b32.xlu0 %v1068, 126
        %v1073 = vpop.permute.xlu0 %1072
        %1074 = vrot.lane.b32.xlu0 %v1069, 126
        %v1075 = vpop.permute.xlu0 %1074
        %v1078 = vadd.f32 %v1064, %v1073
        %v1079 = vadd.f32 %v1065, %v1075
        %s1080 = sld [smem:[#allocation10 + $0x3]]
        %v1081 = vstv %s1080
        %v1082 = vmul.f32 %v1081, %v1043
        %v1083 = vmul.f32 %v1081, %v1044
        %v1084 = vmul.f32 %v1081, %v1045
        %v1088 = vrot.slane %v1082, 1
        %v1089 = vrot.slane %v1083, 1
        %v1090 = vsel %vm419, %v1088, %v1089
        %v1091 = vrot.slane %v1084, 1
        %v1092 = vsel %vm419, %v1089, %v1091
        %v1095 = vadd.f32 %v1078, %v1090
        %v1096 = vadd.f32 %v1079, %v1092
        %s1097 = sld [smem:[#allocation10 + $0x4]]
        %v1098 = vstv %s1097
        %v1099 = vmul.f32 %v1098, %v1043
        %v1100 = vmul.f32 %v1098, %v1044
        %v1101 = vmul.f32 %v1098, %v1045
        %v1105 = vrot.slane %v1099, 1
        %v1106 = vrot.slane %v1100, 1
        %v1107 = vsel %vm419, %v1105, %v1106
        %v1108 = vrot.slane %v1101, 1
        %v1109 = vsel %vm419, %v1106, %v1108
        %1110 = vrot.lane.b32.xlu0 %v1107, 127
        %v1111 = vpop.permute.xlu0 %1110
        %1112 = vrot.lane.b32.xlu0 %v1109, 127
        %v1113 = vpop.permute.xlu0 %1112
        %v1116 = vadd.f32 %v1095, %v1111
        %v1117 = vadd.f32 %v1096, %v1113
        %s1118 = sld [smem:[#allocation10 + $0x5]]
        %v1119 = vstv %s1118
        %v1120 = vmul.f32 %v1119, %v1043
        %v1121 = vmul.f32 %v1119, %v1044
        %v1122 = vmul.f32 %v1119, %v1045
        %v1126 = vrot.slane %v1120, 1
        %v1127 = vrot.slane %v1121, 1
        %v1128 = vsel %vm419, %v1126, %v1127
        %v1129 = vrot.slane %v1122, 1
        %v1130 = vsel %vm419, %v1127, %v1129
        %1131 = vrot.lane.b32.xlu0 %v1128, 126
        %v1132 = vpop.permute.xlu0 %1131
        %1133 = vrot.lane.b32.xlu0 %v1130, 126
        %v1134 = vpop.permute.xlu0 %1133
        %v1137 = vadd.f32 %v1116, %v1132
        %v1138 = vadd.f32 %v1117, %v1134
        %s1139 = sld [smem:[#allocation10 + $0x6]]
        %v1140 = vstv %s1139
        %v1141 = vmul.f32 %v1140, %v1043
        %v1142 = vmul.f32 %v1140, %v1044
        %v1143 = vmul.f32 %v1140, %v1045
        %v1147 = vrot.slane %v1141, 2
        %v1148 = vrot.slane %v1142, 2
        %v1149 = vsel %vm479, %v1147, %v1148
        %v1150 = vrot.slane %v1143, 2
        %v1151 = vsel %vm479, %v1148, %v1150
        %v1154 = vadd.f32 %v1137, %v1149
        %v1155 = vadd.f32 %v1138, %v1151
        %s1156 = sld [smem:[#allocation10 + $0x7]]
        %v1157 = vstv %s1156
        %v1158 = vmul.f32 %v1157, %v1043
        %v1159 = vmul.f32 %v1157, %v1044
        %v1160 = vmul.f32 %v1157, %v1045
        %v1164 = vrot.slane %v1158, 2
        %v1165 = vrot.slane %v1159, 2
        %v1166 = vsel %vm479, %v1164, %v1165
        %v1167 = vrot.slane %v1160, 2
        %v1168 = vsel %vm479, %v1165, %v1167
        %1169 = vrot.lane.b32.xlu0 %v1166, 127
        %v1170 = vpop.permute.xlu0 %1169
        %1171 = vrot.lane.b32.xlu0 %v1168, 127
        %v1172 = vpop.permute.xlu0 %1171
        %v1175 = vadd.f32 %v1154, %v1170
        %v1176 = vadd.f32 %v1155, %v1172
        %s1177 = sld [smem:[#allocation10 + $0x8]]
        %v1178 = vstv %s1177
        %v1179 = vmul.f32 %v1178, %v1043
        %v1180 = vmul.f32 %v1178, %v1044
        %v1181 = vmul.f32 %v1178, %v1045
        %v1185 = vrot.slane %v1179, 2
        %v1186 = vrot.slane %v1180, 2
        %v1187 = vsel %vm479, %v1185, %v1186
        %v1188 = vrot.slane %v1181, 2
        %v1189 = vsel %vm479, %v1186, %v1188
        %1190 = vrot.lane.b32.xlu0 %v1187, 126
        %v1191 = vpop.permute.xlu0 %1190
        %1192 = vrot.lane.b32.xlu0 %v1189, 126
        %v1193 = vpop.permute.xlu0 %1192
        %v1196 = vadd.f32 %v1175, %v1191
        %v1197 = vadd.f32 %v1176, %v1193
        %v1198 = vld [vmem:[%s705] sm:$0xff]
        %v1199 = vld [vmem:[%s705 + $0x8] sm:$0xff]
        %v1200 = vld [vmem:[%s705 + $0x10] sm:$0x3]
        %s1201 = sld [smem:[#allocation10 + $0x9]]
        %v1202 = vstv %s1201
        %v1203 = vmul.f32 %v1202, %v1198
        %v1204 = vmul.f32 %v1202, %v1199
        %v1205 = vadd.f32 %v1196, %v1203
        %v1206 = vadd.f32 %v1197, %v1204
        %s1207 = sld [smem:[#allocation10 + $0xa]]
        %v1208 = vstv %s1207
        %v1209 = vmul.f32 %v1208, %v1198
        %v1210 = vmul.f32 %v1208, %v1199
        %1213 = vrot.lane.b32.xlu0 %v1209, 127
        %v1214 = vpop.permute.xlu0 %1213
        %1215 = vrot.lane.b32.xlu0 %v1210, 127
        %v1216 = vpop.permute.xlu0 %1215
        %v1219 = vadd.f32 %v1205, %v1214
        %v1220 = vadd.f32 %v1206, %v1216
        %s1221 = sld [smem:[#allocation10 + $0xb]]
        %v1222 = vstv %s1221
        %v1223 = vmul.f32 %v1222, %v1198
        %v1224 = vmul.f32 %v1222, %v1199
        %1227 = vrot.lane.b32.xlu0 %v1223, 126
        %v1228 = vpop.permute.xlu0 %1227
        %1229 = vrot.lane.b32.xlu0 %v1224, 126
        %v1230 = vpop.permute.xlu0 %1229
        %v1233 = vadd.f32 %v1219, %v1228
        %v1234 = vadd.f32 %v1220, %v1230
        %s1235 = sld [smem:[#allocation10 + $0xc]]
        %v1236 = vstv %s1235
        %v1237 = vmul.f32 %v1236, %v1198
        %v1238 = vmul.f32 %v1236, %v1199
        %v1239 = vmul.f32 %v1236, %v1200
        %v1243 = vrot.slane %v1237, 1
        %v1244 = vrot.slane %v1238, 1
        %v1245 = vsel %vm419, %v1243, %v1244
        %v1246 = vrot.slane %v1239, 1
        %v1247 = vsel %vm419, %v1244, %v1246
        %v1250 = vadd.f32 %v1233, %v1245
        %v1251 = vadd.f32 %v1234, %v1247
        %s1252 = sld [smem:[#allocation10 + $0xd]]
        %v1253 = vstv %s1252
        %v1254 = vmul.f32 %v1253, %v1198
        %v1255 = vmul.f32 %v1253, %v1199
        %v1256 = vmul.f32 %v1253, %v1200
        %v1260 = vrot.slane %v1254, 1
        %v1261 = vrot.slane %v1255, 1
        %v1262 = vsel %vm419, %v1260, %v1261
        %v1263 = vrot.slane %v1256, 1
        %v1264 = vsel %vm419, %v1261, %v1263
        %1265 = vrot.lane.b32.xlu0 %v1262, 127
        %v1266 = vpop.permute.xlu0 %1265
        %1267 = vrot.lane.b32.xlu0 %v1264, 127
        %v1268 = vpop.permute.xlu0 %1267
        %v1271 = vadd.f32 %v1250, %v1266
        %v1272 = vadd.f32 %v1251, %v1268
        %s1273 = sld [smem:[#allocation10 + $0xe]]
        %v1274 = vstv %s1273
        %v1275 = vmul.f32 %v1274, %v1198
        %v1276 = vmul.f32 %v1274, %v1199
        %v1277 = vmul.f32 %v1274, %v1200
        %v1281 = vrot.slane %v1275, 1
        %v1282 = vrot.slane %v1276, 1
        %v1283 = vsel %vm419, %v1281, %v1282
        %v1284 = vrot.slane %v1277, 1
        %v1285 = vsel %vm419, %v1282, %v1284
        %1286 = vrot.lane.b32.xlu0 %v1283, 126
        %v1287 = vpop.permute.xlu0 %1286
        %1288 = vrot.lane.b32.xlu0 %v1285, 126
        %v1289 = vpop.permute.xlu0 %1288
        %v1292 = vadd.f32 %v1271, %v1287
        %v1293 = vadd.f32 %v1272, %v1289
        %s1294 = sld [smem:[#allocation10 + $0xf]]
        %v1295 = vstv %s1294
        %v1296 = vmul.f32 %v1295, %v1198
        %v1297 = vmul.f32 %v1295, %v1199
        %v1298 = vmul.f32 %v1295, %v1200
        %v1302 = vrot.slane %v1296, 2
        %v1303 = vrot.slane %v1297, 2
        %v1304 = vsel %vm479, %v1302, %v1303
        %v1305 = vrot.slane %v1298, 2
        %v1306 = vsel %vm479, %v1303, %v1305
        %v1309 = vadd.f32 %v1292, %v1304
        %v1310 = vadd.f32 %v1293, %v1306
        %s1311 = sld [smem:[#allocation10 + $0x10]]
        %v1312 = vstv %s1311
        %v1313 = vmul.f32 %v1312, %v1198
        %v1314 = vmul.f32 %v1312, %v1199
        %v1315 = vmul.f32 %v1312, %v1200
        %v1319 = vrot.slane %v1313, 2
        %v1320 = vrot.slane %v1314, 2
        %v1321 = vsel %vm479, %v1319, %v1320
        %v1322 = vrot.slane %v1315, 2
        %v1323 = vsel %vm479, %v1320, %v1322
        %1324 = vrot.lane.b32.xlu0 %v1321, 127
        %v1325 = vpop.permute.xlu0 %1324
        %1326 = vrot.lane.b32.xlu0 %v1323, 127
        %v1327 = vpop.permute.xlu0 %1326
        %v1330 = vadd.f32 %v1309, %v1325
        %v1331 = vadd.f32 %v1310, %v1327
        %s1332 = sld [smem:[#allocation10 + $0x11]]
        %v1333 = vstv %s1332
        %v1334 = vmul.f32 %v1333, %v1198
        %v1335 = vmul.f32 %v1333, %v1199
        %v1336 = vmul.f32 %v1333, %v1200
        %v1340 = vrot.slane %v1334, 2
        %v1341 = vrot.slane %v1335, 2
        %v1342 = vsel %vm479, %v1340, %v1341
        %v1343 = vrot.slane %v1336, 2
        %v1344 = vsel %vm479, %v1341, %v1343
        %1345 = vrot.lane.b32.xlu0 %v1342, 126
        %v1346 = vpop.permute.xlu0 %1345
        %1347 = vrot.lane.b32.xlu0 %v1344, 126
        %v1348 = vpop.permute.xlu0 %1347
        %v1351 = vadd.f32 %v1330, %v1346
        %v1352 = vadd.f32 %v1331, %v1348
        %v1353 = vld [vmem:[%s871] sm:$0xff]
        %v1354 = vld [vmem:[%s871 + $0x8] sm:$0xff]
        %v1355 = vld [vmem:[%s871 + $0x10] sm:$0x3]
        %s1356 = sld [smem:[#allocation10 + $0x12]]
        %v1357 = vstv %s1356
        %v1358 = vmul.f32 %v1357, %v1353
        %v1359 = vmul.f32 %v1357, %v1354
        %v1360 = vadd.f32 %v1351, %v1358
        %v1361 = vadd.f32 %v1352, %v1359
        %s1362 = sld [smem:[#allocation10 + $0x13]]
        %v1363 = vstv %s1362
        %v1364 = vmul.f32 %v1363, %v1353
        %v1365 = vmul.f32 %v1363, %v1354
        %1368 = vrot.lane.b32.xlu0 %v1364, 127
        %v1369 = vpop.permute.xlu0 %1368
        %1370 = vrot.lane.b32.xlu0 %v1365, 127
        %v1371 = vpop.permute.xlu0 %1370
        %v1374 = vadd.f32 %v1360, %v1369
        %v1375 = vadd.f32 %v1361, %v1371
        %s1376 = sld [smem:[#allocation10 + $0x14]]
        %v1377 = vstv %s1376
        %v1378 = vmul.f32 %v1377, %v1353
        %v1379 = vmul.f32 %v1377, %v1354
        %1382 = vrot.lane.b32.xlu0 %v1378, 126
        %v1383 = vpop.permute.xlu0 %1382
        %1384 = vrot.lane.b32.xlu0 %v1379, 126
        %v1385 = vpop.permute.xlu0 %1384
        %v1388 = vadd.f32 %v1374, %v1383
        %v1389 = vadd.f32 %v1375, %v1385
        %s1390 = sld [smem:[#allocation10 + $0x15]]
        %v1391 = vstv %s1390
        %v1392 = vmul.f32 %v1391, %v1353
        %v1393 = vmul.f32 %v1391, %v1354
        %v1394 = vmul.f32 %v1391, %v1355
        %v1398 = vrot.slane %v1392, 1
        %v1399 = vrot.slane %v1393, 1
        %v1400 = vsel %vm419, %v1398, %v1399
        %v1401 = vrot.slane %v1394, 1
        %v1402 = vsel %vm419, %v1399, %v1401
        %v1405 = vadd.f32 %v1388, %v1400
        %v1406 = vadd.f32 %v1389, %v1402
        %s1407 = sld [smem:[#allocation10 + $0x16]]
        %v1408 = vstv %s1407
        %v1409 = vmul.f32 %v1408, %v1353
        %v1410 = vmul.f32 %v1408, %v1354
        %v1411 = vmul.f32 %v1408, %v1355
        %v1415 = vrot.slane %v1409, 1
        %v1416 = vrot.slane %v1410, 1
        %v1417 = vsel %vm419, %v1415, %v1416
        %v1418 = vrot.slane %v1411, 1
        %v1419 = vsel %vm419, %v1416, %v1418
        %1420 = vrot.lane.b32.xlu0 %v1417, 127
        %v1421 = vpop.permute.xlu0 %1420
        %1422 = vrot.lane.b32.xlu0 %v1419, 127
        %v1423 = vpop.permute.xlu0 %1422
        %v1426 = vadd.f32 %v1405, %v1421
        %v1427 = vadd.f32 %v1406, %v1423
        %s1428 = sld [smem:[#allocation10 + $0x17]]
        %v1429 = vstv %s1428
        %v1430 = vmul.f32 %v1429, %v1353
        %v1431 = vmul.f32 %v1429, %v1354
        %v1432 = vmul.f32 %v1429, %v1355
        %v1436 = vrot.slane %v1430, 1
        %v1437 = vrot.slane %v1431, 1
        %v1438 = vsel %vm419, %v1436, %v1437
        %v1439 = vrot.slane %v1432, 1
        %v1440 = vsel %vm419, %v1437, %v1439
        %1441 = vrot.lane.b32.xlu0 %v1438, 126
        %v1442 = vpop.permute.xlu0 %1441
        %1443 = vrot.lane.b32.xlu0 %v1440, 126
        %v1444 = vpop.permute.xlu0 %1443
        %v1447 = vadd.f32 %v1426, %v1442
        %v1448 = vadd.f32 %v1427, %v1444
        %s1449 = sld [smem:[#allocation10 + $0x18]]
        %v1450 = vstv %s1449
        %v1451 = vmul.f32 %v1450, %v1353
        %v1452 = vmul.f32 %v1450, %v1354
        %v1453 = vmul.f32 %v1450, %v1355
        %v1457 = vrot.slane %v1451, 2
        %v1458 = vrot.slane %v1452, 2
        %v1459 = vsel %vm479, %v1457, %v1458
        %v1460 = vrot.slane %v1453, 2
        %v1461 = vsel %vm479, %v1458, %v1460
        %v1464 = vadd.f32 %v1447, %v1459
        %v1465 = vadd.f32 %v1448, %v1461
        %s1466 = sld [smem:[#allocation10 + $0x19]]
        %v1467 = vstv %s1466
        %v1468 = vmul.f32 %v1467, %v1353
        %v1469 = vmul.f32 %v1467, %v1354
        %v1470 = vmul.f32 %v1467, %v1355
        %v1474 = vrot.slane %v1468, 2
        %v1475 = vrot.slane %v1469, 2
        %v1476 = vsel %vm479, %v1474, %v1475
        %v1477 = vrot.slane %v1470, 2
        %v1478 = vsel %vm479, %v1475, %v1477
        %1479 = vrot.lane.b32.xlu0 %v1476, 127
        %v1480 = vpop.permute.xlu0 %1479
        %1481 = vrot.lane.b32.xlu0 %v1478, 127
        %v1482 = vpop.permute.xlu0 %1481
        %v1485 = vadd.f32 %v1464, %v1480
        %v1486 = vadd.f32 %v1465, %v1482
        %s1487 = sld [smem:[#allocation10 + $0x1a]]
        %v1488 = vstv %s1487
        %v1489 = vmul.f32 %v1488, %v1353
        %v1490 = vmul.f32 %v1488, %v1354
        %v1491 = vmul.f32 %v1488, %v1355
        %v1495 = vrot.slane %v1489, 2
        %v1496 = vrot.slane %v1490, 2
        %v1497 = vsel %vm479, %v1495, %v1496
        %v1498 = vrot.slane %v1491, 2
        %v1499 = vsel %vm479, %v1496, %v1498
        %1500 = vrot.lane.b32.xlu0 %v1497, 126
        %v1501 = vpop.permute.xlu0 %1500
        %1502 = vrot.lane.b32.xlu0 %v1499, 126
        %v1503 = vpop.permute.xlu0 %1502
        %v1506 = vadd.f32 %v1485, %v1501
        %v1507 = vadd.f32 %v1486, %v1503
        %v1508 = vld [vmem:[%s1037] sm:$0xff]
        %v1509 = vld [vmem:[%s1037 + $0x8] sm:$0xff]
        %v1510 = vld [vmem:[%s1037 + $0x10] sm:$0x3]
        %s1511 = sld [smem:[#allocation10 + $0x1b]]
        %v1512 = vstv %s1511
        %v1513 = vmul.f32 %v1512, %v1508
        %v1514 = vmul.f32 %v1512, %v1509
        %v1515 = vadd.f32 %v1506, %v1513
        %v1516 = vadd.f32 %v1507, %v1514
        %s1517 = sld [smem:[#allocation10 + $0x1c]]
        %v1518 = vstv %s1517
        %v1519 = vmul.f32 %v1518, %v1508
        %v1520 = vmul.f32 %v1518, %v1509
        %1523 = vrot.lane.b32.xlu0 %v1519, 127
        %v1524 = vpop.permute.xlu0 %1523
        %1525 = vrot.lane.b32.xlu0 %v1520, 127
        %v1526 = vpop.permute.xlu0 %1525
        %v1529 = vadd.f32 %v1515, %v1524
        %v1530 = vadd.f32 %v1516, %v1526
        %s1531 = sld [smem:[#allocation10 + $0x1d]]
        %v1532 = vstv %s1531
        %v1533 = vmul.f32 %v1532, %v1508
        %v1534 = vmul.f32 %v1532, %v1509
        %1537 = vrot.lane.b32.xlu0 %v1533, 126
        %v1538 = vpop.permute.xlu0 %1537
        %1539 = vrot.lane.b32.xlu0 %v1534, 126
        %v1540 = vpop.permute.xlu0 %1539
        %v1543 = vadd.f32 %v1529, %v1538
        %v1544 = vadd.f32 %v1530, %v1540
        %s1545 = sld [smem:[#allocation10 + $0x1e]]
        %v1546 = vstv %s1545
        %v1547 = vmul.f32 %v1546, %v1508
        %v1548 = vmul.f32 %v1546, %v1509
        %v1549 = vmul.f32 %v1546, %v1510
        %v1553 = vrot.slane %v1547, 1
        %v1554 = vrot.slane %v1548, 1
        %v1555 = vsel %vm419, %v1553, %v1554
        %v1556 = vrot.slane %v1549, 1
        %v1557 = vsel %vm419, %v1554, %v1556
        %v1560 = vadd.f32 %v1543, %v1555
        %v1561 = vadd.f32 %v1544, %v1557
        %s1562 = sld [smem:[#allocation10 + $0x1f]]
        %v1563 = vstv %s1562
        %v1564 = vmul.f32 %v1563, %v1508
        %v1565 = vmul.f32 %v1563, %v1509
        %v1566 = vmul.f32 %v1563, %v1510
        %v1570 = vrot.slane %v1564, 1
        %v1571 = vrot.slane %v1565, 1
        %v1572 = vsel %vm419, %v1570, %v1571
        %v1573 = vrot.slane %v1566, 1
        %v1574 = vsel %vm419, %v1571, %v1573
        %1575 = vrot.lane.b32.xlu0 %v1572, 127
        %v1576 = vpop.permute.xlu0 %1575
        %1577 = vrot.lane.b32.xlu0 %v1574, 127
        %v1578 = vpop.permute.xlu0 %1577
        %v1581 = vadd.f32 %v1560, %v1576
        %v1582 = vadd.f32 %v1561, %v1578
        %s1583 = sld [smem:[#allocation10 + $0x20]]
        %v1584 = vstv %s1583
        %v1585 = vmul.f32 %v1584, %v1508
        %v1586 = vmul.f32 %v1584, %v1509
        %v1587 = vmul.f32 %v1584, %v1510
        %v1591 = vrot.slane %v1585, 1
        %v1592 = vrot.slane %v1586, 1
        %v1593 = vsel %vm419, %v1591, %v1592
        %v1594 = vrot.slane %v1587, 1
        %v1595 = vsel %vm419, %v1592, %v1594
        %1596 = vrot.lane.b32.xlu0 %v1593, 126
        %v1597 = vpop.permute.xlu0 %1596
        %1598 = vrot.lane.b32.xlu0 %v1595, 126
        %v1599 = vpop.permute.xlu0 %1598
        %v1602 = vadd.f32 %v1581, %v1597
        %v1603 = vadd.f32 %v1582, %v1599
        %s1604 = sld [smem:[#allocation10 + $0x21]]
        %v1605 = vstv %s1604
        %v1606 = vmul.f32 %v1605, %v1508
        %v1607 = vmul.f32 %v1605, %v1509
        %v1608 = vmul.f32 %v1605, %v1510
        %v1612 = vrot.slane %v1606, 2
        %v1613 = vrot.slane %v1607, 2
        %v1614 = vsel %vm479, %v1612, %v1613
        %v1615 = vrot.slane %v1608, 2
        %v1616 = vsel %vm479, %v1613, %v1615
        %v1619 = vadd.f32 %v1602, %v1614
        %v1620 = vadd.f32 %v1603, %v1616
        %s1621 = sld [smem:[#allocation10 + $0x22]]
        %v1622 = vstv %s1621
        %v1623 = vmul.f32 %v1622, %v1508
        %v1624 = vmul.f32 %v1622, %v1509
        %v1625 = vmul.f32 %v1622, %v1510
        %v1629 = vrot.slane %v1623, 2
        %v1630 = vrot.slane %v1624, 2
        %v1631 = vsel %vm479, %v1629, %v1630
        %v1632 = vrot.slane %v1625, 2
        %v1633 = vsel %vm479, %v1630, %v1632
        %1634 = vrot.lane.b32.xlu0 %v1631, 127
        %v1635 = vpop.permute.xlu0 %1634
        %1636 = vrot.lane.b32.xlu0 %v1633, 127
        %v1637 = vpop.permute.xlu0 %1636
        %v1640 = vadd.f32 %v1619, %v1635
        %v1641 = vadd.f32 %v1620, %v1637
        %s1642 = sld [smem:[#allocation10 + $0x23]]
        %v1643 = vstv %s1642
        %v1644 = vmul.f32 %v1643, %v1508
        %v1645 = vmul.f32 %v1643, %v1509
        %v1646 = vmul.f32 %v1643, %v1510
        %v1650 = vrot.slane %v1644, 2
        %v1651 = vrot.slane %v1645, 2
        %v1652 = vsel %vm479, %v1650, %v1651
        %v1653 = vrot.slane %v1646, 2
        %v1654 = vsel %vm479, %v1651, %v1653
        %1655 = vrot.lane.b32.xlu0 %v1652, 126
        %v1656 = vpop.permute.xlu0 %1655
        %1657 = vrot.lane.b32.xlu0 %v1654, 126
        %v1658 = vpop.permute.xlu0 %1657
        %v1661 = vadd.f32 %v1640, %v1656
        %v1662 = vadd.f32 %v1641, %v1658
        %v1663 = vlaneseq
        %vm1664 = vcmp.ge.s32.totalorder %v1663, 0
        %vm1665 = vcmp.lt.s32.totalorder %v1663, 16
        %vm1666 = vmand %vm1664, %vm1665
        %1667 = vst.msk [vmem:[#allocation3] sm:$0x1] %vm1666, %v1661
        %1669 = vst [vmem:[#allocation1] sm:$0xff] %v1661
        %s1670 = scalar_lea.vmem [#allocation1], 1
        %v1671 = vld [vmem:[%s1670] ss:$9 sm:$0xff]
        %1672 = vrot.lane.b32.xlu0 %v1671, 16
        %v1673 = vpop.permute.xlu0 %1672
        %vm1675 = vcmp.ge.s32.totalorder %v1663, 16
        %vm1676 = vcmp.lt.s32.totalorder %v1663, 32
        %vm1677 = vmand %vm1675, %vm1676
        %1678 = vst.msk [vmem:[#allocation3] sm:$0x1] %vm1677, %v1673
        %1679 = vst [vmem:[#allocation1] sm:$0xff] %v1661
        %s1680 = scalar_lea.vmem [#allocation1], 2
        %v1681 = vld [vmem:[%s1680] ss:$9 sm:$0xff]
        %1682 = vrot.lane.b32.xlu0 %v1681, 32
        %v1683 = vpop.permute.xlu0 %1682
        %vm1685 = vcmp.ge.s32.totalorder %v1663, 32
        %vm1686 = vcmp.lt.s32.totalorder %v1663, 48
        %vm1687 = vmand %vm1685, %vm1686
        %1688 = vst.msk [vmem:[#allocation3] sm:$0x1] %vm1687, %v1683
        %1689 = vst [vmem:[#allocation1] sm:$0xff] %v1661
        %s1690 = scalar_lea.vmem [#allocation1], 3
        %v1691 = vld [vmem:[%s1690] ss:$9 sm:$0xff]
        %1692 = vrot.lane.b32.xlu0 %v1691, 48
        %v1693 = vpop.permute.xlu0 %1692
        %vm1695 = vcmp.ge.s32.totalorder %v1663, 48
        %vm1696 = vcmp.lt.s32.totalorder %v1663, 64
        %vm1697 = vmand %vm1695, %vm1696
        %1698 = vst.msk [vmem:[#allocation3] sm:$0x1] %vm1697, %v1693
        %1699 = vst [vmem:[#allocation1] sm:$0xff] %v1661
        %s1700 = scalar_lea.vmem [#allocation1], 4
        %v1701 = vld [vmem:[%s1700] ss:$9 sm:$0xff]
        %1702 = vrot.lane.b32.xlu0 %v1701, 64
        %v1703 = vpop.permute.xlu0 %1702
        %vm1705 = vcmp.ge.s32.totalorder %v1663, 64
        %vm1706 = vcmp.lt.s32.totalorder %v1663, 80
        %vm1707 = vmand %vm1705, %vm1706
        %1708 = vst.msk [vmem:[#allocation3] sm:$0x1] %vm1707, %v1703
        %1709 = vst [vmem:[#allocation1] sm:$0xff] %v1661
        %s1710 = scalar_lea.vmem [#allocation1], 5
        %v1711 = vld [vmem:[%s1710] ss:$9 sm:$0xff]
        %1712 = vrot.lane.b32.xlu0 %v1711, 80
        %v1713 = vpop.permute.xlu0 %1712
        %vm1715 = vcmp.ge.s32.totalorder %v1663, 80
        %vm1716 = vcmp.lt.s32.totalorder %v1663, 96
        %vm1717 = vmand %vm1715, %vm1716
        %1718 = vst.msk [vmem:[#allocation3] sm:$0x1] %vm1717, %v1713
        %1719 = vst [vmem:[#allocation1] sm:$0xff] %v1661
        %s1720 = scalar_lea.vmem [#allocation1], 6
        %v1721 = vld [vmem:[%s1720] ss:$9 sm:$0xff]
        %1722 = vrot.lane.b32.xlu0 %v1721, 96
        %v1723 = vpop.permute.xlu0 %1722
        %vm1725 = vcmp.ge.s32.totalorder %v1663, 96
        %vm1726 = vcmp.lt.s32.totalorder %v1663, 112
        %vm1727 = vmand %vm1725, %vm1726
        %1728 = vst.msk [vmem:[#allocation3] sm:$0x1] %vm1727, %v1723
        %1729 = vst [vmem:[#allocation1] sm:$0xff] %v1661
        %s1730 = scalar_lea.vmem [#allocation1], 7
        %v1731 = vld [vmem:[%s1730] ss:$9 sm:$0xff]
        %1732 = vrot.lane.b32.xlu0 %v1731, 112
        %v1733 = vpop.permute.xlu0 %1732
        %vm1735 = vcmp.ge.s32.totalorder %v1663, 112
        %vm1736 = vcmp.lt.s32.totalorder %v1663, 128
        %vm1737 = vmand %vm1735, %vm1736
        %1738 = vst.msk [vmem:[#allocation3] sm:$0x1] %vm1737, %v1733
        %1739 = vst.msk [vmem:[#allocation3 + $0x1] sm:$0x1] %vm1666, %v1662
        %1741 = vst [vmem:[#allocation1] sm:$0xff] %v1662
        %s1742 = scalar_lea.vmem [#allocation1], 1
        %v1743 = vld [vmem:[%s1742] ss:$9 sm:$0xff]
        %1744 = vrot.lane.b32.xlu0 %v1743, 16
        %v1745 = vpop.permute.xlu0 %1744
        %1747 = vst.msk [vmem:[#allocation3 + $0x1] sm:$0x1] %vm1677, %v1745
        %1748 = vst [vmem:[#allocation1] sm:$0xff] %v1662
        %s1749 = scalar_lea.vmem [#allocation1], 2
        %v1750 = vld [vmem:[%s1749] ss:$9 sm:$0xff]
        %1751 = vrot.lane.b32.xlu0 %v1750, 32
        %v1752 = vpop.permute.xlu0 %1751
        %1754 = vst.msk [vmem:[#allocation3 + $0x1] sm:$0x1] %vm1687, %v1752
        %1755 = vst [vmem:[#allocation1] sm:$0xff] %v1662
        %s1756 = scalar_lea.vmem [#allocation1], 3
        %v1757 = vld [vmem:[%s1756] ss:$9 sm:$0xff]
        %1758 = vrot.lane.b32.xlu0 %v1757, 48
        %v1759 = vpop.permute.xlu0 %1758
        %1761 = vst.msk [vmem:[#allocation3 + $0x1] sm:$0x1] %vm1697, %v1759
        %1762 = vst [vmem:[#allocation1] sm:$0xff] %v1662
        %s1763 = scalar_lea.vmem [#allocation1], 4
        %v1764 = vld [vmem:[%s1763] ss:$9 sm:$0xff]
        %1765 = vrot.lane.b32.xlu0 %v1764, 64
        %v1766 = vpop.permute.xlu0 %1765
        %1768 = vst.msk [vmem:[#allocation3 + $0x1] sm:$0x1] %vm1707, %v1766
        %1769 = vst [vmem:[#allocation1] sm:$0xff] %v1662
        %s1770 = scalar_lea.vmem [#allocation1], 5
        %v1771 = vld [vmem:[%s1770] ss:$9 sm:$0xff]
        %1772 = vrot.lane.b32.xlu0 %v1771, 80
        %v1773 = vpop.permute.xlu0 %1772
        %1775 = vst.msk [vmem:[#allocation3 + $0x1] sm:$0x1] %vm1717, %v1773
        %1776 = vst [vmem:[#allocation1] sm:$0xff] %v1662
        %s1777 = scalar_lea.vmem [#allocation1], 6
        %v1778 = vld [vmem:[%s1777] ss:$9 sm:$0xff]
        %1779 = vrot.lane.b32.xlu0 %v1778, 96
        %v1780 = vpop.permute.xlu0 %1779
        %1782 = vst.msk [vmem:[#allocation3 + $0x1] sm:$0x1] %vm1727, %v1780
        %1783 = vst [vmem:[#allocation1] sm:$0xff] %v1662
        %s1784 = scalar_lea.vmem [#allocation1], 7
        %v1785 = vld [vmem:[%s1784] ss:$9 sm:$0xff]
        %1786 = vrot.lane.b32.xlu0 %v1785, 112
        %v1787 = vpop.permute.xlu0 %1786
        %1789 = vst.msk [vmem:[#allocation3 + $0x1] sm:$0x1] %vm1737, %v1787
        %v1790 = vld [vmem:[%s351] sm:$0xff]
        %v1791 = vld [vmem:[%s351 + $0x8] sm:$0xff]
        %v1792 = vld [vmem:[%s351 + $0x10] sm:$0xff]
        %v1793 = vld [vmem:[%s351 + $0x18] sm:$0xff]
        %v1794 = vld [vmem:[%s346] sm:$0xff]
        %v1795 = vld [vmem:[%s346 + $0x8] sm:$0xff]
        %v1796 = vadd.f32 %v1794, 1.0
        %v1797 = vadd.f32 %v1795, 1.0
        %1799 = vset.pattern.permute.xlu0 0
        %1800 = vperm.xlu0 %1799, %v1796
        %v1801 = vpop.permute.xlu0 %1800
        %1804 = vset.pattern.permute.xlu0 0
        %1805 = vperm.xlu0 %1804, %v1797
        %v1806 = vpop.permute.xlu0 %1805
        %v1808 = vmul.f32 %v1790, %v1801
        %v1809 = vmul.f32 %v1791, %v1801
        %v1810 = vmul.f32 %v1792, %v1806
        %v1811 = vmul.f32 %v1793, %v1806
        %v1812 = vld [vmem:[#allocation3] sm:$0x3]
        %v1814 = vperm.slane %v1812, 0
        %v1815 = vperm.slane %v1812, 1
        %v1818 = vadd.f32 %v1808, %v1814
        %v1819 = vadd.f32 %v1809, %v1815
        %v1820 = vadd.f32 %v1810, %v1814
        %v1821 = vadd.f32 %v1811, %v1815
        %1822 = vst [vmem:[%s341] sm:$0xff] %v1818
        %1823 = vst [vmem:[%s341 + $0x8] sm:$0xff] %v1819
        %1824 = vst [vmem:[%s341 + $0x10] sm:$0xff] %v1820
        %1825 = vst [vmem:[%s341 + $0x18] sm:$0xff] %v1821
        %s1826 = sand.u32 %s194, 1
        %s1827 = scalar_lea.sflag [#allocation6], %s1826
        %s1828 = sand.u32 %s194, 1
        %s1829 = smul.addr %s1828, 32
        %s1830 = scalar_lea.vmem [#allocation11], %s1829
        // Predicated region
        $region61: #{tpu_custom_call.1} parent=47 // pred_check
          %p1831 = pneg %p204
        $region62: #{tpu_custom_call.1} parent=47 // pred_check_branch
          %1833 = sbr.rel (%p1831) target = $region64
        $region63: #{tpu_custom_call.1} parent=47 // pred_region
          %1835 = vsyncadd %s1827, 0
          %s1836 = smul.addr %s24, 4
          %s1837 = smul.addr %s1836, 8
          %s1838 = scalar_lea.hbm %s7, %s1837
          %s1839 = sshll.u32 %s1830, 4
          %s1840 = int_to_ptr.vmem [resolvable:$true] %s1839
          %s1841 = sshll.u32 %s1838, 4
          %s1842 = int_to_ptr.hbm [resolvable:$true] %s1841
          %1847 = dma.vmem_to_hbm [thread:$0]  %s1840, 512, %s1842, %s1827, 256, 256, 16
        $region64: #{tpu_custom_call.1} parent=47 // pred_fallthru
          _
      $region48: #{tpu_custom_call.1} parent=5 // pred_fallthru
        _
      %p1848 = scmp.le.s32.totalorder 2, %s19
      // Predicated region
      $region65: #{tpu_custom_call.1} parent=5 // pred_check
        %p1849 = pneg %p1848
      $region66: #{tpu_custom_call.1} parent=5 // pred_check_branch
        %1851 = sbr.rel (%p1849) target = $region68
      $region67: #{tpu_custom_call.1} parent=5 // pred_region
        %s1852 = ssub.s32 %s19, 2
        // Predicated region
        $region69: #{tpu_custom_call.1} parent=67 // pred_check
          %p1853 = pneg %p210
        $region70: #{tpu_custom_call.1} parent=67 // pred_check_branch
          %1855 = sbr.rel (%p1853) target = $region72
        $region71: #{tpu_custom_call.1} parent=67 // pred_region
          %s1856 = sand.u32 %s195, 1
          %s1857 = scalar_lea.sflag [#allocation6], %s1856
          %s1858 = sand.u32 %s195, 1
          %s1859 = smul.addr %s1858, 32
          %s1860 = scalar_lea.vmem [#allocation11], %s1859
          %1862 = dma.done %s1857, 512
        $region72: #{tpu_custom_call.1} parent=67 // pred_fallthru
          _
      $region68: #{tpu_custom_call.1} parent=5 // pred_fallthru
        _
    $region6: #{tpu_custom_call.1} parent=1 // loop_footer
      %s23 = sadd.s32 1, %s19
    $region7: #{tpu_custom_call.1} parent=1 // loop_footer_branch
      %18 = sbr.rel target = $region3
    $region8: #{tpu_custom_call.1} parent=1 // loop_exit
      _
    %1863 = vsyncpa [#allocation6], 1
    %s1864 = scalar_lea.sflag [#allocation6], 1
    %1865 = vsyncpa %s1864, 1
    %1866 = vsyncpa [#allocation7], 1
    %s1867 = scalar_lea.sflag [#allocation7], 1
    %1868 = vsyncpa %s1867, 1
    %1869 = vsyncpa [#allocation9], 1

</llo_original>
